<compile_context>
chip_gen: v5e
topology: v5e:2x2
jax: 0.10.0
libtpu: 0.0.40
codegen_flags: <defaults>
</compile_context>

<pallas_src>
import functools
import math

import jax
import jax.numpy as jnp
from jax.experimental import pallas as pl
from jax.experimental.pallas import tpu as pltpu


# ----------------------------------------------------------------------------
# Generation-aware tiling / compiler parameters
# ----------------------------------------------------------------------------
def _tpu_vmem_capacity_bytes():
    try:
        return int(pltpu.get_tpu_info().vmem_capacity_bytes)
    except Exception:
        return 64 * 1024 * 1024  # conservative (v7x-sized) fallback


_VMEM_CAP = _tpu_vmem_capacity_bytes()
_VMEM_LIMIT = min(int(_VMEM_CAP * 0.6), 100 * 1024 * 1024)
# v7x has 64 MiB VMEM -> smaller row tile; v5e/v6e (128 MiB) use 512 rows.
# TODO(synk): sweep TM=1024 on v6e (extra VMEM headroom) per the tile roofline.
_ROW_TILE = 256 if _VMEM_CAP <= 64 * 1024 * 1024 else 512


def _row_tile(n):
    # Full array is always a legal block; otherwise the chip-aware row tile.
    return n if n <= _ROW_TILE else _ROW_TILE


def _cparams(semantics):
    return pltpu.CompilerParams(
        dimension_semantics=semantics, vmem_limit_bytes=_VMEM_LIMIT
    )


def _pinned(shape):
    # Grid-invariant (constant index_map) weight operand: single-buffered so
    # resident weights don't cost 2x VMEM (important on v7x's 64 MiB).
    return pl.BlockSpec(shape, lambda *_: (0,) * len(shape),
                        pipeline_mode=pl.Buffered(1))


def _layernorm_f32(x, gamma, beta, feat, eps):
    # torch parity: unbiased std (ddof=1), eps added to std (outside the sqrt).
    mean = jnp.mean(x, axis=-1, keepdims=True)
    diff = x - mean
    var = jnp.sum(diff * diff, axis=-1, keepdims=True) * (1.0 / (feat - 1))
    # Exact reciprocal: these kernels are memory-bound, approx buys nothing and
    # risks parity drift in the normalization path.
    return diff / (jnp.sqrt(var) + eps) * gamma + beta


# ----------------------------------------------------------------------------
# Kernel 1: fused LayerNorm0 + Q/K/V projections   (N, D) -> 3 x (N, D) bf16
# ----------------------------------------------------------------------------
def _ln_qkv_kernel(x_ref, g_ref, b_ref, wq_ref, wk_ref, wv_ref,
                   bq_ref, bk_ref, bv_ref, q_ref, k_ref, v_ref,
                   *, feat, eps, q_scale):
    ln = _layernorm_f32(x_ref[...], g_ref[...], b_ref[...], feat, eps)
    ln_bf = ln.astype(jnp.bfloat16)
    q = jnp.dot(ln_bf, wq_ref[...], preferred_element_type=jnp.float32) + bq_ref[...]
    k = jnp.dot(ln_bf, wk_ref[...], preferred_element_type=jnp.float32) + bk_ref[...]
    v = jnp.dot(ln_bf, wv_ref[...], preferred_element_type=jnp.float32) + bv_ref[...]
    q_ref[...] = (q * q_scale).astype(jnp.bfloat16)   # fold 1/sqrt(d_k) into Q
    k_ref[...] = k.astype(jnp.bfloat16)
    v_ref[...] = v.astype(jnp.bfloat16)


def ln_qkv(x2d, gamma, beta, wq, wk, wv, bq, bk, bv, *, q_scale, eps=1e-6):
    n, d = x2d.shape
    tm = _row_tile(n)
    row = pl.BlockSpec((tm, d), lambda i: (i, 0))
    vec = pl.BlockSpec((1, d), lambda i: (0, 0))
    w = _pinned((d, d))
    out_sds = jax.ShapeDtypeStruct((n, d), jnp.bfloat16)
    kern = functools.partial(_ln_qkv_kernel, feat=d, eps=eps, q_scale=q_scale)
    return pl.pallas_call(
        kern,
        out_shape=(out_sds, out_sds, out_sds),
        grid=(pl.cdiv(n, tm),),
        in_specs=[row, vec, vec, w, w, w, vec, vec, vec],
        out_specs=(row, row, row),
        compiler_params=_cparams(("parallel",)),
    )(x2d, gamma, beta, wq, wk, wv, bq, bk, bv)


# ----------------------------------------------------------------------------
# Kernel 2: attention + output projection + residual (per batch, per q-tile)
# ----------------------------------------------------------------------------
def _attn_proj_kernel(q_ref, k_ref, v_ref, m_ref, x_ref, wo_ref, bo_ref,
                      o_ref, attn_sc, *, n_heads, d_k):
    # q:(tq,D) bf16 (pre-scaled), k/v:(S,D) bf16, m:(1,S) int32 (1=attend),
    # x:(tq,D) f32 residual, wo:(D,D) bf16, bo:(1,D) f32, attn_sc:(tq,D) bf16.
    # TODO(synk): for long sequences, replace the per-head full-S score block
    # with a KV-tiled online-softmax (flash) loop (m/l/acc scratch in f32).
    q = q_ref[...]
    k = k_ref[...]
    v = v_ref[...]
    key_masked = m_ref[...] == 0                            # (1, S) bool
    for h in range(n_heads):                                # heads are lane slices
        lo = h * d_k
        s = jnp.einsum("qd,kd->qk", q[:, lo:lo + d_k], k[:, lo:lo + d_k],
                       preferred_element_type=jnp.float32)  # (tq, S) f32
        s = jnp.where(key_masked, jnp.float32(-1e9), s)     # masked_fill
        s = s - jnp.max(s, axis=-1, keepdims=True)          # stable softmax
        p = jnp.exp(s)
        p = p * pl.reciprocal(jnp.sum(p, axis=-1, keepdims=True), approx=True)
        oh = jnp.dot(p.astype(jnp.bfloat16), v[:, lo:lo + d_k],
                     preferred_element_type=jnp.float32)    # (tq, d_k)
        attn_sc[:, lo:lo + d_k] = oh.astype(jnp.bfloat16)
    # Fused Wo projection + residual -> lane-dense (tq, D) f32 store.
    o_ref[...] = x_ref[...] + (
        jnp.dot(attn_sc[...], wo_ref[...], preferred_element_type=jnp.float32)
        + bo_ref[...]
    )


def attention_proj_residual(q3, k3, v3, mask, x3, wo, bo, *, n_heads, d_k):
    B, S, D = x3.shape
    tq = S if S <= 256 else 256
    kern = functools.partial(_attn_proj_kernel, n_heads=n_heads, d_k=d_k)
    q_spec = pl.BlockSpec((None, tq, D), lambda b, qi: (b, qi, 0))
    kv_spec = pl.BlockSpec((None, S, D), lambda b, qi: (b, 0, 0))
    m_spec = pl.BlockSpec((None, 1, S), lambda b, qi: (b, 0, 0))
    bo_spec = pl.BlockSpec((1, D), lambda b, qi: (0, 0))
    return pl.pallas_call(
        kern,
        out_shape=jax.ShapeDtypeStruct((B, S, D), jnp.float32),
        grid=(B, pl.cdiv(S, tq)),
        in_specs=[q_spec, kv_spec, kv_spec, m_spec, q_spec, _pinned((D, D)),
                  bo_spec],
        out_specs=pl.BlockSpec((None, tq, D), lambda b, qi: (b, qi, 0)),
        scratch_shapes=[pltpu.VMEM((tq, D), jnp.bfloat16)],
        compiler_params=_cparams(("parallel", "parallel")),
    )(q3, k3, v3, mask, x3, wo, bo)


# ----------------------------------------------------------------------------
# Kernel 3: fused LayerNorm1 + FFN + residual   x + relu(ln(x)@W1+b1)@W2+b2
# ----------------------------------------------------------------------------
def _ln_ffn_residual_kernel(x_ref, g_ref, b_ref, w1_ref, b1_ref, w2_ref,
                            b2_ref, o_ref, *, feat, eps):
    x = x_ref[...]
    ln = _layernorm_f32(x, g_ref[...], b_ref[...], feat, eps)
    h = (jnp.dot(ln.astype(jnp.bfloat16), w1_ref[...],
                 preferred_element_type=jnp.float32) + b1_ref[...])
    h = jnp.maximum(h, 0.0)
    o_ref[...] = x + (
        jnp.dot(h.astype(jnp.bfloat16), w2_ref[...],
                preferred_element_type=jnp.float32) + b2_ref[...])


def ln_ffn_residual(x2d, gamma, beta, w1, b1, w2, b2, *, eps=1e-6):
    n, d = x2d.shape
    d_ff = w1.shape[1]
    tm = _row_tile(n)
    row = pl.BlockSpec((tm, d), lambda i: (i, 0))
    vec_d = pl.BlockSpec((1, d), lambda i: (0, 0))
    vec_ff = pl.BlockSpec((1, d_ff), lambda i: (0, 0))
    kern = functools.partial(_ln_ffn_residual_kernel, feat=d, eps=eps)
    return pl.pallas_call(
        kern,
        out_shape=jax.ShapeDtypeStruct((n, d), jnp.float32),
        grid=(pl.cdiv(n, tm),),
        in_specs=[row, vec_d, vec_d, _pinned((d, d_ff)), vec_ff,
                  _pinned((d_ff, d)), vec_d],
        out_specs=row,
        compiler_params=_cparams(("parallel",)),
    )(x2d, gamma, beta, w1, b1, w2, b2)


# ----------------------------------------------------------------------------
# Parameter prep (one-time, outside jit) + forward pass
# ----------------------------------------------------------------------------
def prepare_params(params):
    """bf16 weight casts + bias reshapes, hoisted out of the per-step forward."""
    d = params["wq"].shape[0]
    d_ff = params["w1"].shape[1]
    f32, bf16 = jnp.float32, jnp.bfloat16
    return {
        "ln0_g": params["ln0_g"].astype(f32).reshape(1, d),
        "ln0_b": params["ln0_b"].astype(f32).reshape(1, d),
        "ln1_g": params["ln1_g"].astype(f32).reshape(1, d),
        "ln1_b": params["ln1_b"].astype(f32).reshape(1, d),
        "wq": params["wq"].astype(bf16), "wk": params["wk"].astype(bf16),
        "wv": params["wv"].astype(bf16), "wo": params["wo"].astype(bf16),
        "w1": params["w1"].astype(bf16), "w2": params["w2"].astype(bf16),
        "bq": params["bq"].astype(f32).reshape(1, d),
        "bk": params["bk"].astype(f32).reshape(1, d),
        "bv": params["bv"].astype(f32).reshape(1, d),
        "bo": params["bo"].astype(f32).reshape(1, d),
        "b1": params["b1"].astype(f32).reshape(1, d_ff),
        "b2": params["b2"].astype(f32).reshape(1, d),
    }


def encoder_layer_forward(prep, x, mask, *, n_heads):
    """x: (B, S, D) f32, mask: (B, 1, S) int32 (1 = attend, 0 = masked key)."""
    B, S, D = x.shape
    d_k = D // n_heads
    n = B * S
    x2d = x.reshape(n, D)

    # --- sublayer 0: x + self_attn(LayerNorm0(x), mask) ---------------------
    q2, k2, v2 = ln_qkv(x2d, prep["ln0_g"], prep["ln0_b"],
                        prep["wq"], prep["wk"], prep["wv"],
                        prep["bq"], prep["bk"], prep["bv"],
                        q_scale=1.0 / math.sqrt(d_k))
    # Heads stay packed along the lane dim: these reshapes only split the
    # leading dim (free, no XLA transpose copies).
    q3, k3, v3 = (t.reshape(B, S, D) for t in (q2, k2, v2))
    x = attention_proj_residual(q3, k3, v3, mask, x, prep["wo"], prep["bo"],
                                n_heads=n_heads, d_k=d_k)

    # --- sublayer 1: x + feed_forward(LayerNorm1(x)) -------------------------
    x2d = ln_ffn_residual(x.reshape(n, D), prep["ln1_g"], prep["ln1_b"],
                          prep["w1"], prep["b1"], prep["w2"], prep["b2"])
    return x2d.reshape(B, S, D)


# ----------------------------------------------------------------------------
# Deterministic parameters + pure-JAX reference (for a sanity parity check)
# ----------------------------------------------------------------------------
def init_params(key, d_model, d_ff):
    keys = jax.random.split(key, 8)
    s = 0.02
    return {
        "ln0_g": jnp.ones((d_model,), jnp.float32),
        "ln0_b": jnp.zeros((d_model,), jnp.float32),
        "ln1_g": jnp.ones((d_model,), jnp.float32),
        "ln1_b": jnp.zeros((d_model,), jnp.float32),
        "wq": s * jax.random.normal(keys[0], (d_model, d_model), jnp.float32),
        "bq": jnp.zeros((d_model,), jnp.float32),
        "wk": s * jax.random.normal(keys[1], (d_model, d_model), jnp.float32),
        "bk": jnp.zeros((d_model,), jnp.float32),
        "wv": s * jax.random.normal(keys[2], (d_model, d_model), jnp.float32),
        "bv": jnp.zeros((d_model,), jnp.float32),
        "wo": s * jax.random.normal(keys[3], (d_model, d_model), jnp.float32),
        "bo": jnp.zeros((d_model,), jnp.float32),
        "w1": s * jax.random.normal(keys[4], (d_model, d_ff), jnp.float32),
        "b1": jnp.zeros((d_ff,), jnp.float32),
        "w2": s * jax.random.normal(keys[5], (d_ff, d_model), jnp.float32),
        "b2": jnp.zeros((d_model,), jnp.float32),
    }


def encoder_layer_reference(params, x, mask, *, n_heads):
    def layer_norm(t, g, b, eps=1e-6):
        mean = t.mean(-1, keepdims=True)
        std = jnp.std(t, axis=-1, keepdims=True, ddof=1)
        return g * (t - mean) / (std + eps) + b

    B, S, D = x.shape
    d_k = D // n_heads

    def split_heads(t):
        return t.reshape(B, S, n_heads, d_k).transpose(0, 2, 1, 3)

    ln0 = layer_norm(x, params["ln0_g"], params["ln0_b"])
    q = split_heads(ln0 @ params["wq"] + params["bq"])
    k = split_heads(ln0 @ params["wk"] + params["bk"])
    v = split_heads(ln0 @ params["wv"] + params["bv"])
    s = (q @ jnp.swapaxes(k, -1, -2)) / math.sqrt(d_k)
    s = jnp.where(mask[:, None, :, :] == 0, -1e9, s)
    p = jax.nn.softmax(s, axis=-1)
    attn = (p @ v).transpose(0, 2, 1, 3).reshape(B, S, D)
    x = x + attn @ params["wo"] + params["bo"]
    ln1 = layer_norm(x, params["ln1_g"], params["ln1_b"])
    ff = jnp.maximum(ln1 @ params["w1"] + params["b1"], 0.0)
    return x + ff @ params["w2"] + params["b2"]


if __name__ == "__main__":
    B, S, D, H, D_FF = 2, 8, 32, 4, 64

    key = jax.random.PRNGKey(0)
    k_x, k_p = jax.random.split(key)
    x = jax.random.normal(k_x, (B, S, D), jnp.float32)
    # padding mask: last two key positions of batch 1 are masked out
    mask = jnp.ones((B, 1, S), jnp.int32)
    mask = mask.at[1, 0, S - 2:].set(0)

    params = init_params(k_p, D, D_FF)
    prep = jax.block_until_ready(prepare_params(params))  # one-time, outside jit

    fwd = jax.jit(functools.partial(encoder_layer_forward, n_heads=H))
    out = jax.block_until_ready(fwd(prep, x, mask))
    assert out.shape == (B, S, D)
    assert bool(jnp.all(jnp.isfinite(out)))

    ref = encoder_layer_reference(params, x, mask, n_heads=H)
    max_err = float(jnp.max(jnp.abs(out - ref)))
    assert bool(jnp.allclose(out, ref, rtol=3e-2, atol=3e-2)), max_err
    print("KERNEL_OK")
</pallas_src>

<mosaic_0001>
module attributes {stable_mosaic.version = 11 : i64} {
  func.func @_ln_ffn_residual_kernel(%arg0: i32, %arg1: memref<16x32xf32, #tpu.memory_space<vmem>>, %arg2: memref<1x32xf32, #tpu.memory_space<vmem>>, %arg3: memref<1x32xf32, #tpu.memory_space<vmem>>, %arg4: memref<32x64xbf16, #tpu.memory_space<vmem>>, %arg5: memref<1x64xf32, #tpu.memory_space<vmem>>, %arg6: memref<64x32xbf16, #tpu.memory_space<vmem>>, %arg7: memref<1x32xf32, #tpu.memory_space<vmem>>, %arg8: memref<16x32xf32, #tpu.memory_space<vmem>>) attributes {dimension_semantics = [#tpu.dimension_semantics<parallel>], iteration_bounds = array<i64: 1>, scalar_prefetch = 0 : i64, scratch_operands = 0 : i64, tpu.core_type = #tpu.core_type<tc>, window_params = [{transform_indices = @transform_0, window_bounds = array<i64: 16, 32>}, {pipeline_mode = #tpu.pipeline_mode<synchronous>, transform_indices = @transform_1, window_bounds = array<i64: 1, 32>}, {pipeline_mode = #tpu.pipeline_mode<synchronous>, transform_indices = @transform_2, window_bounds = array<i64: 1, 32>}, {pipeline_mode = #tpu.pipeline_mode<synchronous>, transform_indices = @transform_3, window_bounds = array<i64: 32, 64>}, {pipeline_mode = #tpu.pipeline_mode<synchronous>, transform_indices = @transform_4, window_bounds = array<i64: 1, 64>}, {pipeline_mode = #tpu.pipeline_mode<synchronous>, transform_indices = @transform_5, window_bounds = array<i64: 64, 32>}, {pipeline_mode = #tpu.pipeline_mode<synchronous>, transform_indices = @transform_6, window_bounds = array<i64: 1, 32>}, {transform_indices = @transform_7, window_bounds = array<i64: 16, 32>}]} {
    %c0 = arith.constant 0 : index
    %c0_0 = arith.constant 0 : index
    %0 = vector.load %arg1[%c0, %c0_0] : memref<16x32xf32, #tpu.memory_space<vmem>>, vector<16x32xf32>
    %c0_1 = arith.constant 0 : index
    %c0_2 = arith.constant 0 : index
    %1 = vector.load %arg2[%c0_1, %c0_2] : memref<1x32xf32, #tpu.memory_space<vmem>>, vector<1x32xf32>
    %c0_3 = arith.constant 0 : index
    %c0_4 = arith.constant 0 : index
    %2 = vector.load %arg3[%c0_3, %c0_4] : memref<1x32xf32, #tpu.memory_space<vmem>>, vector<1x32xf32>
    %cst = arith.constant dense<0.000000e+00> : vector<16xf32>
    %3 = vector.multi_reduction <add>, %0, %cst [1] : vector<16x32xf32> to vector<16xf32>
    %4 = vector.shape_cast %3 : vector<16xf32> to vector<16x1xf32>
    %cst_5 = arith.constant 3.200000e+01 : f32
    %5 = vector.broadcast %cst_5 : f32 to vector<16x1xf32>
    %6 = arith.divf %4, %5 : vector<16x1xf32>
    %7 = vector.broadcast %6 : vector<16x1xf32> to vector<16x32xf32>
    %8 = arith.subf %0, %7 : vector<16x32xf32>
    %9 = arith.mulf %8, %8 : vector<16x32xf32>
    %cst_6 = arith.constant dense<0.000000e+00> : vector<16xf32>
    %10 = vector.multi_reduction <add>, %9, %cst_6 [1] : vector<16x32xf32> to vector<16xf32>
    %11 = vector.shape_cast %10 : vector<16xf32> to vector<16x1xf32>
    %cst_7 = arith.constant 0.0322580636 : f32
    %12 = vector.broadcast %cst_7 : f32 to vector<16x1xf32>
    %13 = arith.mulf %11, %12 : vector<16x1xf32>
    %14 = math.sqrt %13 : vector<16x1xf32>
    %cst_8 = arith.constant 9.99999997E-7 : f32
    %15 = vector.broadcast %cst_8 : f32 to vector<16x1xf32>
    %16 = arith.addf %14, %15 : vector<16x1xf32>
    %17 = vector.broadcast %16 : vector<16x1xf32> to vector<16x32xf32>
    %18 = arith.divf %8, %17 : vector<16x32xf32>
    %19 = vector.broadcast %1 : vector<1x32xf32> to vector<16x32xf32>
    %20 = arith.mulf %18, %19 : vector<16x32xf32>
    %21 = vector.broadcast %2 : vector<1x32xf32> to vector<16x32xf32>
    %22 = arith.addf %20, %21 : vector<16x32xf32>
    %23 = arith.truncf %22 : vector<16x32xf32> to vector<16x32xbf16>
    %c0_9 = arith.constant 0 : index
    %c0_10 = arith.constant 0 : index
    %24 = vector.load %arg4[%c0_9, %c0_10] : memref<32x64xbf16, #tpu.memory_space<vmem>>, vector<32x64xbf16>
    %cst_11 = arith.constant dense<0.000000e+00> : vector<16x64xf32>
    %25 = tpu.matmul %23, %24, %cst_11 {dimension_numbers = #tpu.dot_dimension_numbers<[1], [0], [0], [1], [0, 0, 1, 1], [], []>} : vector<16x32xbf16>, vector<32x64xbf16>, vector<16x64xf32> -> vector<16x64xf32>
    %c0_12 = arith.constant 0 : index
    %c0_13 = arith.constant 0 : index
    %26 = vector.load %arg5[%c0_12, %c0_13] : memref<1x64xf32, #tpu.memory_space<vmem>>, vector<1x64xf32>
    %27 = vector.broadcast %26 : vector<1x64xf32> to vector<16x64xf32>
    %28 = arith.addf %25, %27 : vector<16x64xf32>
    %cst_14 = arith.constant 0.000000e+00 : f32
    %29 = vector.broadcast %cst_14 : f32 to vector<16x64xf32>
    %30 = arith.maximumf %28, %29 : vector<16x64xf32>
    %31 = arith.truncf %30 : vector<16x64xf32> to vector<16x64xbf16>
    %c0_15 = arith.constant 0 : index
    %c0_16 = arith.constant 0 : index
    %32 = vector.load %arg6[%c0_15, %c0_16] : memref<64x32xbf16, #tpu.memory_space<vmem>>, vector<64x32xbf16>
    %cst_17 = arith.constant dense<0.000000e+00> : vector<16x32xf32>
    %33 = tpu.matmul %31, %32, %cst_17 {dimension_numbers = #tpu.dot_dimension_numbers<[1], [0], [0], [1], [0, 0, 1, 1], [], []>} : vector<16x64xbf16>, vector<64x32xbf16>, vector<16x32xf32> -> vector<16x32xf32>
    %c0_18 = arith.constant 0 : index
    %c0_19 = arith.constant 0 : index
    %34 = vector.load %arg7[%c0_18, %c0_19] : memref<1x32xf32, #tpu.memory_space<vmem>>, vector<1x32xf32>
    %35 = vector.broadcast %34 : vector<1x32xf32> to vector<16x32xf32>
    %36 = arith.addf %33, %35 : vector<16x32xf32>
    %37 = arith.addf %0, %36 : vector<16x32xf32>
    %c0_20 = arith.constant 0 : index
    %c0_21 = arith.constant 0 : index
    %38 = vector.load %arg8[%c0_20, %c0_21] : memref<16x32xf32, #tpu.memory_space<vmem>>, vector<16x32xf32>
    tpu.vector_store %arg8[%c0_20, %c0_21], %37 {strides = array<i32>} : memref<16x32xf32, #tpu.memory_space<vmem>>, vector<16x32xf32>,
    return
  }
  func.func @transform_0(%arg0: i32) -> (i32, i32) {
    %c0_i32 = arith.constant 0 : i32
    %c0_i32_0 = arith.constant 0 : i32
    return %arg0, %c0_i32 : i32, i32
  }
  func.func @transform_1(%arg0: i32) -> (i32, i32) {
    %c0_i32 = arith.constant 0 : i32
    %c0_i32_0 = arith.constant 0 : i32
    %c0_i32_1 = arith.constant 0 : i32
    return %c0_i32, %c0_i32_0 : i32, i32
  }
  func.func @transform_2(%arg0: i32) -> (i32, i32) {
    %c0_i32 = arith.constant 0 : i32
    %c0_i32_0 = arith.constant 0 : i32
    %c0_i32_1 = arith.constant 0 : i32
    return %c0_i32, %c0_i32_0 : i32, i32
  }
  func.func @transform_3(%arg0: i32) -> (i32, i32) {
    %c0_i32 = arith.constant 0 : i32
    %c0_i32_0 = arith.constant 0 : i32
    %c0_i32_1 = arith.constant 0 : i32
    return %c0_i32, %c0_i32_0 : i32, i32
  }
  func.func @transform_4(%arg0: i32) -> (i32, i32) {
    %c0_i32 = arith.constant 0 : i32
    %c0_i32_0 = arith.constant 0 : i32
    %c0_i32_1 = arith.constant 0 : i32
    return %c0_i32, %c0_i32_0 : i32, i32
  }
  func.func @transform_5(%arg0: i32) -> (i32, i32) {
    %c0_i32 = arith.constant 0 : i32
    %c0_i32_0 = arith.constant 0 : i32
    %c0_i32_1 = arith.constant 0 : i32
    return %c0_i32, %c0_i32_0 : i32, i32
  }
  func.func @transform_6(%arg0: i32) -> (i32, i32) {
    %c0_i32 = arith.constant 0 : i32
    %c0_i32_0 = arith.constant 0 : i32
    %c0_i32_1 = arith.constant 0 : i32
    return %c0_i32, %c0_i32_0 : i32, i32
  }
  func.func @transform_7(%arg0: i32) -> (i32, i32) {
    %c0_i32 = arith.constant 0 : i32
    %c0_i32_0 = arith.constant 0 : i32
    return %arg0, %c0_i32 : i32, i32
  }
}

module attributes {stable_mosaic.version = 11 : i64} {
  func.func @_attn_proj_kernel(%arg0: i32, %arg1: i32, %arg2: memref<1x8x32xbf16, #tpu.memory_space<vmem>>, %arg3: memref<1x8x32xbf16, #tpu.memory_space<vmem>>, %arg4: memref<1x8x32xbf16, #tpu.memory_space<vmem>>, %arg5: memref<1x1x8xi32, #tpu.memory_space<vmem>>, %arg6: memref<1x8x32xf32, #tpu.memory_space<vmem>>, %arg7: memref<32x32xbf16, #tpu.memory_space<vmem>>, %arg8: memref<1x32xf32, #tpu.memory_space<vmem>>, %arg9: memref<1x8x32xf32, #tpu.memory_space<vmem>>, %arg10: memref<8x32xbf16, #tpu.memory_space<vmem>>) attributes {dimension_semantics = [#tpu.dimension_semantics<parallel>, #tpu.dimension_semantics<parallel>], iteration_bounds = array<i64: 2, 1>, scalar_prefetch = 0 : i64, scratch_operands = 1 : i64, tpu.core_type = #tpu.core_type<tc>, window_params = [{transform_indices = @transform_0, window_bounds = array<i64: 1, 8, 32>}, {transform_indices = @transform_1, window_bounds = array<i64: 1, 8, 32>}, {transform_indices = @transform_2, window_bounds = array<i64: 1, 8, 32>}, {transform_indices = @transform_3, window_bounds = array<i64: 1, 1, 8>}, {transform_indices = @transform_4, window_bounds = array<i64: 1, 8, 32>}, {pipeline_mode = #tpu.pipeline_mode<synchronous>, transform_indices = @transform_5, window_bounds = array<i64: 32, 32>}, {pipeline_mode = #tpu.pipeline_mode<synchronous>, transform_indices = @transform_6, window_bounds = array<i64: 1, 32>}, {transform_indices = @transform_7, window_bounds = array<i64: 1, 8, 32>}]} {
    %c0 = arith.constant 0 : index
    %c0_0 = arith.constant 0 : index
    %c0_1 = arith.constant 0 : index
    %0 = vector.load %arg2[%c0, %c0_0, %c0_1] : memref<1x8x32xbf16, #tpu.memory_space<vmem>>, vector<1x8x32xbf16>
    %1 = vector.shape_cast %0 : vector<1x8x32xbf16> to vector<8x32xbf16>
    %c0_2 = arith.constant 0 : index
    %c0_3 = arith.constant 0 : index
    %c0_4 = arith.constant 0 : index
    %2 = vector.load %arg3[%c0_2, %c0_3, %c0_4] : memref<1x8x32xbf16, #tpu.memory_space<vmem>>, vector<1x8x32xbf16>
    %3 = vector.shape_cast %2 : vector<1x8x32xbf16> to vector<8x32xbf16>
    %c0_5 = arith.constant 0 : index
    %c0_6 = arith.constant 0 : index
    %c0_7 = arith.constant 0 : index
    %4 = vector.load %arg4[%c0_5, %c0_6, %c0_7] : memref<1x8x32xbf16, #tpu.memory_space<vmem>>, vector<1x8x32xbf16>
    %5 = vector.shape_cast %4 : vector<1x8x32xbf16> to vector<8x32xbf16>
    %c0_8 = arith.constant 0 : index
    %c0_9 = arith.constant 0 : index
    %c0_10 = arith.constant 0 : index
    %6 = vector.load %arg5[%c0_8, %c0_9, %c0_10] : memref<1x1x8xi32, #tpu.memory_space<vmem>>, vector<1x1x8xi32>
    %7 = vector.shape_cast %6 : vector<1x1x8xi32> to vector<1x8xi32>
    %c0_i32 = arith.constant 0 : i32
    %8 = vector.broadcast %c0_i32 : i32 to vector<1x8xi32>
    %9 = arith.cmpi eq, %7, %8 : vector<1x8xi32>
    %10 = vector.extract_strided_slice %1 {offsets = [0, 0], sizes = [8, 8], strides = [1, 1]} : vector<8x32xbf16> to vector<8x8xbf16>
    %11 = vector.extract_strided_slice %3 {offsets = [0, 0], sizes = [8, 8], strides = [1, 1]} : vector<8x32xbf16> to vector<8x8xbf16>
    "tpu.trace_start"() <{level = 10 : i32, message = "qd,kd->qk"}> : () -> ()
    %cst = arith.constant dense<0.000000e+00> : vector<8x8xf32>
    %12 = tpu.matmul %10, %11, %cst {dimension_numbers = #tpu.dot_dimension_numbers<[1], [1], [0], [0], [0, 0, 1, 0], [], []>} : vector<8x8xbf16>, vector<8x8xbf16>, vector<8x8xf32> -> vector<8x8xf32>
    %cst_11 = arith.constant -1.000000e+09 : f32
    "tpu.trace_stop"() : () -> ()
    %13 = vector.shape_cast %9 : vector<1x8xi1> to vector<1x8xi1>
    %14 = vector.broadcast %13 : vector<1x8xi1> to vector<8x8xi1>
    %15 = vector.broadcast %cst_11 : f32 to vector<8x8xf32>
    %16 = arith.select %14, %15, %12 : vector<8x8xi1>, vector<8x8xf32>
    %cst_12 = arith.constant dense<0xFF800000> : vector<8xf32>
    %17 = vector.multi_reduction <maximumf>, %16, %cst_12 [1] : vector<8x8xf32> to vector<8xf32>
    %18 = vector.shape_cast %17 : vector<8xf32> to vector<8x1xf32>
    %19 = vector.broadcast %18 : vector<8x1xf32> to vector<8x8xf32>
    %20 = arith.subf %16, %19 : vector<8x8xf32>
    %21 = math.exp %20 : vector<8x8xf32>
    %cst_13 = arith.constant dense<0.000000e+00> : vector<8xf32>
    %22 = vector.multi_reduction <add>, %21, %cst_13 [1] : vector<8x8xf32> to vector<8xf32>
    %23 = vector.shape_cast %22 : vector<8xf32> to vector<8x1xf32>
    %24 = tpu.reciprocal %23 {approx = true} : vector<8x1xf32> -> vector<8x1xf32>
    %25 = vector.broadcast %24 : vector<8x1xf32> to vector<8x8xf32>
    %26 = arith.mulf %21, %25 : vector<8x8xf32>
    %27 = arith.truncf %26 : vector<8x8xf32> to vector<8x8xbf16>
    %28 = vector.extract_strided_slice %5 {offsets = [0, 0], sizes = [8, 8], strides = [1, 1]} : vector<8x32xbf16> to vector<8x8xbf16>
    %cst_14 = arith.constant dense<0.000000e+00> : vector<8x8xf32>
    %29 = tpu.matmul %27, %28, %cst_14 {dimension_numbers = #tpu.dot_dimension_numbers<[1], [0], [0], [1], [0, 0, 1, 1], [], []>} : vector<8x8xbf16>, vector<8x8xbf16>, vector<8x8xf32> -> vector<8x8xf32>
    %30 = arith.truncf %29 : vector<8x8xf32> to vector<8x8xbf16>
    %c0_15 = arith.constant 0 : index
    %c0_16 = arith.constant 0 : index
    %31 = vector.load %arg10[%c0_15, %c0_16] : memref<8x32xbf16, #tpu.memory_space<vmem>>, vector<8x8xbf16>
    tpu.vector_store %arg10[%c0_15, %c0_16], %30 {strides = array<i32>} : memref<8x32xbf16, #tpu.memory_space<vmem>>, vector<8x8xbf16>,
    %32 = vector.extract_strided_slice %1 {offsets = [0, 8], sizes = [8, 8], strides = [1, 1]} : vector<8x32xbf16> to vector<8x8xbf16>
    %33 = vector.extract_strided_slice %3 {offsets = [0, 8], sizes = [8, 8], strides = [1, 1]} : vector<8x32xbf16> to vector<8x8xbf16>
    "tpu.trace_start"() <{level = 10 : i32, message = "qd,kd->qk"}> : () -> ()
    %cst_17 = arith.constant dense<0.000000e+00> : vector<8x8xf32>
    %34 = tpu.matmul %32, %33, %cst_17 {dimension_numbers = #tpu.dot_dimension_numbers<[1], [1], [0], [0], [0, 0, 1, 0], [], []>} : vector<8x8xbf16>, vector<8x8xbf16>, vector<8x8xf32> -> vector<8x8xf32>
    %cst_18 = arith.constant -1.000000e+09 : f32
    "tpu.trace_stop"() : () -> ()
    %35 = vector.shape_cast %9 : vector<1x8xi1> to vector<1x8xi1>
    %36 = vector.broadcast %35 : vector<1x8xi1> to vector<8x8xi1>
    %37 = vector.broadcast %cst_18 : f32 to vector<8x8xf32>
    %38 = arith.select %36, %37, %34 : vector<8x8xi1>, vector<8x8xf32>
    %cst_19 = arith.constant dense<0xFF800000> : vector<8xf32>
    %39 = vector.multi_reduction <maximumf>, %38, %cst_19 [1] : vector<8x8xf32> to vector<8xf32>
    %40 = vector.shape_cast %39 : vector<8xf32> to vector<8x1xf32>
    %41 = vector.broadcast %40 : vector<8x1xf32> to vector<8x8xf32>
    %42 = arith.subf %38, %41 : vector<8x8xf32>
    %43 = math.exp %42 : vector<8x8xf32>
    %cst_20 = arith.constant dense<0.000000e+00> : vector<8xf32>
    %44 = vector.multi_reduction <add>, %43, %cst_20 [1] : vector<8x8xf32> to vector<8xf32>
    %45 = vector.shape_cast %44 : vector<8xf32> to vector<8x1xf32>
    %46 = tpu.reciprocal %45 {approx = true} : vector<8x1xf32> -> vector<8x1xf32>
    %47 = vector.broadcast %46 : vector<8x1xf32> to vector<8x8xf32>
    %48 = arith.mulf %43, %47 : vector<8x8xf32>
    %49 = arith.truncf %48 : vector<8x8xf32> to vector<8x8xbf16>
    %50 = vector.extract_strided_slice %5 {offsets = [0, 8], sizes = [8, 8], strides = [1, 1]} : vector<8x32xbf16> to vector<8x8xbf16>
    %cst_21 = arith.constant dense<0.000000e+00> : vector<8x8xf32>
    %51 = tpu.matmul %49, %50, %cst_21 {dimension_numbers = #tpu.dot_dimension_numbers<[1], [0], [0], [1], [0, 0, 1, 1], [], []>} : vector<8x8xbf16>, vector<8x8xbf16>, vector<8x8xf32> -> vector<8x8xf32>
    %52 = arith.truncf %51 : vector<8x8xf32> to vector<8x8xbf16>
    %c0_22 = arith.constant 0 : index
    %c8 = arith.constant 8 : index
    %53 = vector.load %arg10[%c0_22, %c8] : memref<8x32xbf16, #tpu.memory_space<vmem>>, vector<8x8xbf16>
    tpu.vector_store %arg10[%c0_22, %c8], %52 {strides = array<i32>} : memref<8x32xbf16, #tpu.memory_space<vmem>>, vector<8x8xbf16>,
    %54 = vector.extract_strided_slice %1 {offsets = [0, 16], sizes = [8, 8], strides = [1, 1]} : vector<8x32xbf16> to vector<8x8xbf16>
    %55 = vector.extract_strided_slice %3 {offsets = [0, 16], sizes = [8, 8], strides = [1, 1]} : vector<8x32xbf16> to vector<8x8xbf16>
    "tpu.trace_start"() <{level = 10 : i32, message = "qd,kd->qk"}> : () -> ()
    %cst_23 = arith.constant dense<0.000000e+00> : vector<8x8xf32>
    %56 = tpu.matmul %54, %55, %cst_23 {dimension_numbers = #tpu.dot_dimension_numbers<[1], [1], [0], [0], [0, 0, 1, 0], [], []>} : vector<8x8xbf16>, vector<8x8xbf16>, vector<8x8xf32> -> vector<8x8xf32>
    %cst_24 = arith.constant -1.000000e+09 : f32
    "tpu.trace_stop"() : () -> ()
    %57 = vector.shape_cast %9 : vector<1x8xi1> to vector<1x8xi1>
    %58 = vector.broadcast %57 : vector<1x8xi1> to vector<8x8xi1>
    %59 = vector.broadcast %cst_24 : f32 to vector<8x8xf32>
    %60 = arith.select %58, %59, %56 : vector<8x8xi1>, vector<8x8xf32>
    %cst_25 = arith.constant dense<0xFF800000> : vector<8xf32>
    %61 = vector.multi_reduction <maximumf>, %60, %cst_25 [1] : vector<8x8xf32> to vector<8xf32>
    %62 = vector.shape_cast %61 : vector<8xf32> to vector<8x1xf32>
    %63 = vector.broadcast %62 : vector<8x1xf32> to vector<8x8xf32>
    %64 = arith.subf %60, %63 : vector<8x8xf32>
    %65 = math.exp %64 : vector<8x8xf32>
    %cst_26 = arith.constant dense<0.000000e+00> : vector<8xf32>
    %66 = vector.multi_reduction <add>, %65, %cst_26 [1] : vector<8x8xf32> to vector<8xf32>
    %67 = vector.shape_cast %66 : vector<8xf32> to vector<8x1xf32>
    %68 = tpu.reciprocal %67 {approx = true} : vector<8x1xf32> -> vector<8x1xf32>
    %69 = vector.broadcast %68 : vector<8x1xf32> to vector<8x8xf32>
    %70 = arith.mulf %65, %69 : vector<8x8xf32>
    %71 = arith.truncf %70 : vector<8x8xf32> to vector<8x8xbf16>
    %72 = vector.extract_strided_slice %5 {offsets = [0, 16], sizes = [8, 8], strides = [1, 1]} : vector<8x32xbf16> to vector<8x8xbf16>
    %cst_27 = arith.constant dense<0.000000e+00> : vector<8x8xf32>
    %73 = tpu.matmul %71, %72, %cst_27 {dimension_numbers = #tpu.dot_dimension_numbers<[1], [0], [0], [1], [0, 0, 1, 1], [], []>} : vector<8x8xbf16>, vector<8x8xbf16>, vector<8x8xf32> -> vector<8x8xf32>
    %74 = arith.truncf %73 : vector<8x8xf32> to vector<8x8xbf16>
    %c0_28 = arith.constant 0 : index
    %c16 = arith.constant 16 : index
    %75 = vector.load %arg10[%c0_28, %c16] : memref<8x32xbf16, #tpu.memory_space<vmem>>, vector<8x8xbf16>
    tpu.vector_store %arg10[%c0_28, %c16], %74 {strides = array<i32>} : memref<8x32xbf16, #tpu.memory_space<vmem>>, vector<8x8xbf16>,
    %76 = vector.extract_strided_slice %1 {offsets = [0, 24], sizes = [8, 8], strides = [1, 1]} : vector<8x32xbf16> to vector<8x8xbf16>
    %77 = vector.extract_strided_slice %3 {offsets = [0, 24], sizes = [8, 8], strides = [1, 1]} : vector<8x32xbf16> to vector<8x8xbf16>
    "tpu.trace_start"() <{level = 10 : i32, message = "qd,kd->qk"}> : () -> ()
    %cst_29 = arith.constant dense<0.000000e+00> : vector<8x8xf32>
    %78 = tpu.matmul %76, %77, %cst_29 {dimension_numbers = #tpu.dot_dimension_numbers<[1], [1], [0], [0], [0, 0, 1, 0], [], []>} : vector<8x8xbf16>, vector<8x8xbf16>, vector<8x8xf32> -> vector<8x8xf32>
    %cst_30 = arith.constant -1.000000e+09 : f32
    "tpu.trace_stop"() : () -> ()
    %79 = vector.shape_cast %9 : vector<1x8xi1> to vector<1x8xi1>
    %80 = vector.broadcast %79 : vector<1x8xi1> to vector<8x8xi1>
    %81 = vector.broadcast %cst_30 : f32 to vector<8x8xf32>
    %82 = arith.select %80, %81, %78 : vector<8x8xi1>, vector<8x8xf32>
    %cst_31 = arith.constant dense<0xFF800000> : vector<8xf32>
    %83 = vector.multi_reduction <maximumf>, %82, %cst_31 [1] : vector<8x8xf32> to vector<8xf32>
    %84 = vector.shape_cast %83 : vector<8xf32> to vector<8x1xf32>
    %85 = vector.broadcast %84 : vector<8x1xf32> to vector<8x8xf32>
    %86 = arith.subf %82, %85 : vector<8x8xf32>
    %87 = math.exp %86 : vector<8x8xf32>
    %cst_32 = arith.constant dense<0.000000e+00> : vector<8xf32>
    %88 = vector.multi_reduction <add>, %87, %cst_32 [1] : vector<8x8xf32> to vector<8xf32>
    %89 = vector.shape_cast %88 : vector<8xf32> to vector<8x1xf32>
    %90 = tpu.reciprocal %89 {approx = true} : vector<8x1xf32> -> vector<8x1xf32>
    %91 = vector.broadcast %90 : vector<8x1xf32> to vector<8x8xf32>
    %92 = arith.mulf %87, %91 : vector<8x8xf32>
    %93 = arith.truncf %92 : vector<8x8xf32> to vector<8x8xbf16>
    %94 = vector.extract_strided_slice %5 {offsets = [0, 24], sizes = [8, 8], strides = [1, 1]} : vector<8x32xbf16> to vector<8x8xbf16>
    %cst_33 = arith.constant dense<0.000000e+00> : vector<8x8xf32>
    %95 = tpu.matmul %93, %94, %cst_33 {dimension_numbers = #tpu.dot_dimension_numbers<[1], [0], [0], [1], [0, 0, 1, 1], [], []>} : vector<8x8xbf16>, vector<8x8xbf16>, vector<8x8xf32> -> vector<8x8xf32>
    %96 = arith.truncf %95 : vector<8x8xf32> to vector<8x8xbf16>
    %c0_34 = arith.constant 0 : index
    %c24 = arith.constant 24 : index
    %97 = vector.load %arg10[%c0_34, %c24] : memref<8x32xbf16, #tpu.memory_space<vmem>>, vector<8x8xbf16>
    tpu.vector_store %arg10[%c0_34, %c24], %96 {strides = array<i32>} : memref<8x32xbf16, #tpu.memory_space<vmem>>, vector<8x8xbf16>,
    %c0_35 = arith.constant 0 : index
    %c0_36 = arith.constant 0 : index
    %c0_37 = arith.constant 0 : index
    %98 = vector.load %arg6[%c0_35, %c0_36, %c0_37] : memref<1x8x32xf32, #tpu.memory_space<vmem>>, vector<1x8x32xf32>
    %99 = vector.shape_cast %98 : vector<1x8x32xf32> to vector<8x32xf32>
    %c0_38 = arith.constant 0 : index
    %c0_39 = arith.constant 0 : index
    %100 = vector.load %arg10[%c0_38, %c0_39] : memref<8x32xbf16, #tpu.memory_space<vmem>>, vector<8x32xbf16>
    %c0_40 = arith.constant 0 : index
    %c0_41 = arith.constant 0 : index
    %101 = vector.load %arg7[%c0_40, %c0_41] : memref<32x32xbf16, #tpu.memory_space<vmem>>, vector<32x32xbf16>
    %cst_42 = arith.constant dense<0.000000e+00> : vector<8x32xf32>
    %102 = tpu.matmul %100, %101, %cst_42 {dimension_numbers = #tpu.dot_dimension_numbers<[1], [0], [0], [1], [0, 0, 1, 1], [], []>} : vector<8x32xbf16>, vector<32x32xbf16>, vector<8x32xf32> -> vector<8x32xf32>
    %c0_43 = arith.constant 0 : index
    %c0_44 = arith.constant 0 : index
    %103 = vector.load %arg8[%c0_43, %c0_44] : memref<1x32xf32, #tpu.memory_space<vmem>>, vector<1x32xf32>
    %104 = vector.broadcast %103 : vector<1x32xf32> to vector<8x32xf32>
    %105 = arith.addf %102, %104 : vector<8x32xf32>
    %106 = arith.addf %99, %105 : vector<8x32xf32>
    %c0_45 = arith.constant 0 : index
    %c0_46 = arith.constant 0 : index
    %c0_47 = arith.constant 0 : index
    %107 = vector.load %arg9[%c0_45, %c0_46, %c0_47] : memref<1x8x32xf32, #tpu.memory_space<vmem>>, vector<1x8x32xf32>
    %108 = vector.shape_cast %107 : vector<1x8x32xf32> to vector<8x32xf32>
    %109 = vector.shape_cast %106 : vector<8x32xf32> to vector<1x8x32xf32>
    tpu.vector_store %arg9[%c0_45, %c0_46, %c0_47], %109 {strides = array<i32>} : memref<1x8x32xf32, #tpu.memory_space<vmem>>, vector<1x8x32xf32>,
    return
  }
  func.func @transform_0(%arg0: i32, %arg1: i32) -> (i32, i32, i32) {
    %c0_i32 = arith.constant 0 : i32
    %c0_i32_0 = arith.constant 0 : i32
    return %arg0, %arg1, %c0_i32 : i32, i32, i32
  }
  func.func @transform_1(%arg0: i32, %arg1: i32) -> (i32, i32, i32) {
    %c0_i32 = arith.constant 0 : i32
    %c0_i32_0 = arith.constant 0 : i32
    %c0_i32_1 = arith.constant 0 : i32
    return %arg0, %c0_i32, %c0_i32_0 : i32, i32, i32
  }
  func.func @transform_2(%arg0: i32, %arg1: i32) -> (i32, i32, i32) {
    %c0_i32 = arith.constant 0 : i32
    %c0_i32_0 = arith.constant 0 : i32
    %c0_i32_1 = arith.constant 0 : i32
    return %arg0, %c0_i32, %c0_i32_0 : i32, i32, i32
  }
  func.func @transform_3(%arg0: i32, %arg1: i32) -> (i32, i32, i32) {
    %c0_i32 = arith.constant 0 : i32
    %c0_i32_0 = arith.constant 0 : i32
    %c0_i32_1 = arith.constant 0 : i32
    return %arg0, %c0_i32, %c0_i32_0 : i32, i32, i32
  }
  func.func @transform_4(%arg0: i32, %arg1: i32) -> (i32, i32, i32) {
    %c0_i32 = arith.constant 0 : i32
    %c0_i32_0 = arith.constant 0 : i32
    return %arg0, %arg1, %c0_i32 : i32, i32, i32
  }
  func.func @transform_5(%arg0: i32, %arg1: i32) -> (i32, i32) {
    %c0_i32 = arith.constant 0 : i32
    %c0_i32_0 = arith.constant 0 : i32
    %c0_i32_1 = arith.constant 0 : i32
    return %c0_i32, %c0_i32_0 : i32, i32
  }
  func.func @transform_6(%arg0: i32, %arg1: i32) -> (i32, i32) {
    %c0_i32 = arith.constant 0 : i32
    %c0_i32_0 = arith.constant 0 : i32
    %c0_i32_1 = arith.constant 0 : i32
    return %c0_i32, %c0_i32_0 : i32, i32
  }
  func.func @transform_7(%arg0: i32, %arg1: i32) -> (i32, i32, i32) {
    %c0_i32 = arith.constant 0 : i32
    %c0_i32_0 = arith.constant 0 : i32
    return %arg0, %arg1, %c0_i32 : i32, i32, i32
  }
}

module attributes {stable_mosaic.version = 11 : i64} {
  func.func @_ln_qkv_kernel(%arg0: i32, %arg1: memref<16x32xf32, #tpu.memory_space<vmem>>, %arg2: memref<1x32xf32, #tpu.memory_space<vmem>>, %arg3: memref<1x32xf32, #tpu.memory_space<vmem>>, %arg4: memref<32x32xbf16, #tpu.memory_space<vmem>>, %arg5: memref<32x32xbf16, #tpu.memory_space<vmem>>, %arg6: memref<32x32xbf16, #tpu.memory_space<vmem>>, %arg7: memref<1x32xf32, #tpu.memory_space<vmem>>, %arg8: memref<1x32xf32, #tpu.memory_space<vmem>>, %arg9: memref<1x32xf32, #tpu.memory_space<vmem>>, %arg10: memref<16x32xbf16, #tpu.memory_space<vmem>>, %arg11: memref<16x32xbf16, #tpu.memory_space<vmem>>, %arg12: memref<16x32xbf16, #tpu.memory_space<vmem>>) attributes {dimension_semantics = [#tpu.dimension_semantics<parallel>], iteration_bounds = array<i64: 1>, scalar_prefetch = 0 : i64, scratch_operands = 0 : i64, tpu.core_type = #tpu.core_type<tc>, window_params = [{transform_indices = @transform_0, window_bounds = array<i64: 16, 32>}, {pipeline_mode = #tpu.pipeline_mode<synchronous>, transform_indices = @transform_1, window_bounds = array<i64: 1, 32>}, {pipeline_mode = #tpu.pipeline_mode<synchronous>, transform_indices = @transform_2, window_bounds = array<i64: 1, 32>}, {pipeline_mode = #tpu.pipeline_mode<synchronous>, transform_indices = @transform_3, window_bounds = array<i64: 32, 32>}, {pipeline_mode = #tpu.pipeline_mode<synchronous>, transform_indices = @transform_4, window_bounds = array<i64: 32, 32>}, {pipeline_mode = #tpu.pipeline_mode<synchronous>, transform_indices = @transform_5, window_bounds = array<i64: 32, 32>}, {pipeline_mode = #tpu.pipeline_mode<synchronous>, transform_indices = @transform_6, window_bounds = array<i64: 1, 32>}, {pipeline_mode = #tpu.pipeline_mode<synchronous>, transform_indices = @transform_7, window_bounds = array<i64: 1, 32>}, {pipeline_mode = #tpu.pipeline_mode<synchronous>, transform_indices = @transform_8, window_bounds = array<i64: 1, 32>}, {transform_indices = @transform_9, window_bounds = array<i64: 16, 32>}, {transform_indices = @transform_10, window_bounds = array<i64: 16, 32>}, {transform_indices = @transform_11, window_bounds = array<i64: 16, 32>}]} {
    %c0 = arith.constant 0 : index
    %c0_0 = arith.constant 0 : index
    %0 = vector.load %arg1[%c0, %c0_0] : memref<16x32xf32, #tpu.memory_space<vmem>>, vector<16x32xf32>
    %c0_1 = arith.constant 0 : index
    %c0_2 = arith.constant 0 : index
    %1 = vector.load %arg2[%c0_1, %c0_2] : memref<1x32xf32, #tpu.memory_space<vmem>>, vector<1x32xf32>
    %c0_3 = arith.constant 0 : index
    %c0_4 = arith.constant 0 : index
    %2 = vector.load %arg3[%c0_3, %c0_4] : memref<1x32xf32, #tpu.memory_space<vmem>>, vector<1x32xf32>
    %cst = arith.constant dense<0.000000e+00> : vector<16xf32>
    %3 = vector.multi_reduction <add>, %0, %cst [1] : vector<16x32xf32> to vector<16xf32>
    %4 = vector.shape_cast %3 : vector<16xf32> to vector<16x1xf32>
    %cst_5 = arith.constant 3.200000e+01 : f32
    %5 = vector.broadcast %cst_5 : f32 to vector<16x1xf32>
    %6 = arith.divf %4, %5 : vector<16x1xf32>
    %7 = vector.broadcast %6 : vector<16x1xf32> to vector<16x32xf32>
    %8 = arith.subf %0, %7 : vector<16x32xf32>
    %9 = arith.mulf %8, %8 : vector<16x32xf32>
    %cst_6 = arith.constant dense<0.000000e+00> : vector<16xf32>
    %10 = vector.multi_reduction <add>, %9, %cst_6 [1] : vector<16x32xf32> to vector<16xf32>
    %11 = vector.shape_cast %10 : vector<16xf32> to vector<16x1xf32>
    %cst_7 = arith.constant 0.0322580636 : f32
    %12 = vector.broadcast %cst_7 : f32 to vector<16x1xf32>
    %13 = arith.mulf %11, %12 : vector<16x1xf32>
    %14 = math.sqrt %13 : vector<16x1xf32>
    %cst_8 = arith.constant 9.99999997E-7 : f32
    %15 = vector.broadcast %cst_8 : f32 to vector<16x1xf32>
    %16 = arith.addf %14, %15 : vector<16x1xf32>
    %17 = vector.broadcast %16 : vector<16x1xf32> to vector<16x32xf32>
    %18 = arith.divf %8, %17 : vector<16x32xf32>
    %19 = vector.broadcast %1 : vector<1x32xf32> to vector<16x32xf32>
    %20 = arith.mulf %18, %19 : vector<16x32xf32>
    %21 = vector.broadcast %2 : vector<1x32xf32> to vector<16x32xf32>
    %22 = arith.addf %20, %21 : vector<16x32xf32>
    %23 = arith.truncf %22 : vector<16x32xf32> to vector<16x32xbf16>
    %c0_9 = arith.constant 0 : index
    %c0_10 = arith.constant 0 : index
    %24 = vector.load %arg4[%c0_9, %c0_10] : memref<32x32xbf16, #tpu.memory_space<vmem>>, vector<32x32xbf16>
    %cst_11 = arith.constant dense<0.000000e+00> : vector<16x32xf32>
    %25 = tpu.matmul %23, %24, %cst_11 {dimension_numbers = #tpu.dot_dimension_numbers<[1], [0], [0], [1], [0, 0, 1, 1], [], []>} : vector<16x32xbf16>, vector<32x32xbf16>, vector<16x32xf32> -> vector<16x32xf32>
    %c0_12 = arith.constant 0 : index
    %c0_13 = arith.constant 0 : index
    %26 = vector.load %arg7[%c0_12, %c0_13] : memref<1x32xf32, #tpu.memory_space<vmem>>, vector<1x32xf32>
    %27 = vector.broadcast %26 : vector<1x32xf32> to vector<16x32xf32>
    %28 = arith.addf %25, %27 : vector<16x32xf32>
    %c0_14 = arith.constant 0 : index
    %c0_15 = arith.constant 0 : index
    %29 = vector.load %arg5[%c0_14, %c0_15] : memref<32x32xbf16, #tpu.memory_space<vmem>>, vector<32x32xbf16>
    %cst_16 = arith.constant dense<0.000000e+00> : vector<16x32xf32>
    %30 = tpu.matmul %23, %29, %cst_16 {dimension_numbers = #tpu.dot_dimension_numbers<[1], [0], [0], [1], [0, 0, 1, 1], [], []>} : vector<16x32xbf16>, vector<32x32xbf16>, vector<16x32xf32> -> vector<16x32xf32>
    %c0_17 = arith.constant 0 : index
    %c0_18 = arith.constant 0 : index
    %31 = vector.load %arg8[%c0_17, %c0_18] : memref<1x32xf32, #tpu.memory_space<vmem>>, vector<1x32xf32>
    %32 = vector.broadcast %31 : vector<1x32xf32> to vector<16x32xf32>
    %33 = arith.addf %30, %32 : vector<16x32xf32>
    %c0_19 = arith.constant 0 : index
    %c0_20 = arith.constant 0 : index
    %34 = vector.load %arg6[%c0_19, %c0_20] : memref<32x32xbf16, #tpu.memory_space<vmem>>, vector<32x32xbf16>
    %cst_21 = arith.constant dense<0.000000e+00> : vector<16x32xf32>
    %35 = tpu.matmul %23, %34, %cst_21 {dimension_numbers = #tpu.dot_dimension_numbers<[1], [0], [0], [1], [0, 0, 1, 1], [], []>} : vector<16x32xbf16>, vector<32x32xbf16>, vector<16x32xf32> -> vector<16x32xf32>
    %c0_22 = arith.constant 0 : index
    %c0_23 = arith.constant 0 : index
    %36 = vector.load %arg9[%c0_22, %c0_23] : memref<1x32xf32, #tpu.memory_space<vmem>>, vector<1x32xf32>
    %37 = vector.broadcast %36 : vector<1x32xf32> to vector<16x32xf32>
    %38 = arith.addf %35, %37 : vector<16x32xf32>
    %cst_24 = arith.constant 0.353553385 : f32
    %39 = vector.broadcast %cst_24 : f32 to vector<16x32xf32>
    %40 = arith.mulf %28, %39 : vector<16x32xf32>
    %41 = arith.truncf %40 : vector<16x32xf32> to vector<16x32xbf16>
    %c0_25 = arith.constant 0 : index
    %c0_26 = arith.constant 0 : index
    %42 = vector.load %arg10[%c0_25, %c0_26] : memref<16x32xbf16, #tpu.memory_space<vmem>>, vector<16x32xbf16>
    tpu.vector_store %arg10[%c0_25, %c0_26], %41 {strides = array<i32>} : memref<16x32xbf16, #tpu.memory_space<vmem>>, vector<16x32xbf16>,
    %43 = arith.truncf %33 : vector<16x32xf32> to vector<16x32xbf16>
    %c0_27 = arith.constant 0 : index
    %c0_28 = arith.constant 0 : index
    %44 = vector.load %arg11[%c0_27, %c0_28] : memref<16x32xbf16, #tpu.memory_space<vmem>>, vector<16x32xbf16>
    tpu.vector_store %arg11[%c0_27, %c0_28], %43 {strides = array<i32>} : memref<16x32xbf16, #tpu.memory_space<vmem>>, vector<16x32xbf16>,
    %45 = arith.truncf %38 : vector<16x32xf32> to vector<16x32xbf16>
    %c0_29 = arith.constant 0 : index
    %c0_30 = arith.constant 0 : index
    %46 = vector.load %arg12[%c0_29, %c0_30] : memref<16x32xbf16, #tpu.memory_space<vmem>>, vector<16x32xbf16>
    tpu.vector_store %arg12[%c0_29, %c0_30], %45 {strides = array<i32>} : memref<16x32xbf16, #tpu.memory_space<vmem>>, vector<16x32xbf16>,
    return
  }
  func.func @transform_0(%arg0: i32) -> (i32, i32) {
    %c0_i32 = arith.constant 0 : i32
    %c0_i32_0 = arith.constant 0 : i32
    return %arg0, %c0_i32 : i32, i32
  }
  func.func @transform_1(%arg0: i32) -> (i32, i32) {
    %c0_i32 = arith.constant 0 : i32
    %c0_i32_0 = arith.constant 0 : i32
    %c0_i32_1 = arith.constant 0 : i32
    return %c0_i32, %c0_i32_0 : i32, i32
  }
  func.func @transform_2(%arg0: i32) -> (i32, i32) {
    %c0_i32 = arith.constant 0 : i32
    %c0_i32_0 = arith.constant 0 : i32
    %c0_i32_1 = arith.constant 0 : i32
    return %c0_i32, %c0_i32_0 : i32, i32
  }
  func.func @transform_3(%arg0: i32) -> (i32, i32) {
    %c0_i32 = arith.constant 0 : i32
    %c0_i32_0 = arith.constant 0 : i32
    %c0_i32_1 = arith.constant 0 : i32
    return %c0_i32, %c0_i32_0 : i32, i32
  }
  func.func @transform_4(%arg0: i32) -> (i32, i32) {
    %c0_i32 = arith.constant 0 : i32
    %c0_i32_0 = arith.constant 0 : i32
    %c0_i32_1 = arith.constant 0 : i32
    return %c0_i32, %c0_i32_0 : i32, i32
  }
  func.func @transform_5(%arg0: i32) -> (i32, i32) {
    %c0_i32 = arith.constant 0 : i32
    %c0_i32_0 = arith.constant 0 : i32
    %c0_i32_1 = arith.constant 0 : i32
    return %c0_i32, %c0_i32_0 : i32, i32
  }
  func.func @transform_6(%arg0: i32) -> (i32, i32) {
    %c0_i32 = arith.constant 0 : i32
    %c0_i32_0 = arith.constant 0 : i32
    %c0_i32_1 = arith.constant 0 : i32
    return %c0_i32, %c0_i32_0 : i32, i32
  }
  func.func @transform_7(%arg0: i32) -> (i32, i32) {
    %c0_i32 = arith.constant 0 : i32
    %c0_i32_0 = arith.constant 0 : i32
    %c0_i32_1 = arith.constant 0 : i32
    return %c0_i32, %c0_i32_0 : i32, i32
  }
  func.func @transform_8(%arg0: i32) -> (i32, i32) {
    %c0_i32 = arith.constant 0 : i32
    %c0_i32_0 = arith.constant 0 : i32
    %c0_i32_1 = arith.constant 0 : i32
    return %c0_i32, %c0_i32_0 : i32, i32
  }
  func.func @transform_9(%arg0: i32) -> (i32, i32) {
    %c0_i32 = arith.constant 0 : i32
    %c0_i32_0 = arith.constant 0 : i32
    return %arg0, %c0_i32 : i32, i32
  }
  func.func @transform_10(%arg0: i32) -> (i32, i32) {
    %c0_i32 = arith.constant 0 : i32
    %c0_i32_0 = arith.constant 0 : i32
    return %arg0, %c0_i32 : i32, i32
  }
  func.func @transform_11(%arg0: i32) -> (i32, i32) {
    %c0_i32 = arith.constant 0 : i32
    %c0_i32_0 = arith.constant 0 : i32
    return %arg0, %c0_i32 : i32, i32
  }
}

</mosaic_0001>

<llo_original>
// kernel: encoder_layer_forward.5
$region0: #{encoder_layer_forward.5}
  #allocation0 [shape = 'u32[]', space=smem, size = 0x4, offset = 0x4, fixed_abs, tag = 'smem constant byte address 0x4 - core index']
  #allocation1 [shape = 'u32[72,128]{1,0:T(1,128)}', space=vmem, size = 0x9000, scoped, tag = 'internal scratch']
  %s0 = inlined_call_operand.vmem [shape: f32[16,32], index: 0, kind: input, shape index: {}]
  %s1 = inlined_call_operand.vmem [shape: f32[1,32], index: 1, kind: input, shape index: {}]
  %s2 = inlined_call_operand.vmem [shape: f32[1,32], index: 2, kind: input, shape index: {}]
  %s3 = inlined_call_operand.vmem [shape: bf16[32,64], index: 3, kind: input, shape index: {}]
  %s4 = inlined_call_operand.vmem [shape: f32[1,64], index: 4, kind: input, shape index: {}]
  %s5 = inlined_call_operand.vmem [shape: bf16[64,32], index: 5, kind: input, shape index: {}]
  %s6 = inlined_call_operand.vmem [shape: f32[1,32], index: 6, kind: input, shape index: {}]
  %s7 = inlined_call_operand.hbm [shape: f32[16,32], index: 7, kind: output, shape index: {}]
  %s8 = sld [smem:[#allocation0]]
  $region38: #{encoder_layer_forward.5} parent=0
    _
  %s10 = ssub.s32 1, %s8
  %s11 = scalar_select 0, %s10, %s8
  $region1: #{encoder_layer_forward.5} parent=0
    #allocation2 [shape = 'u8[8192]{0}', space=vmem, size = 0x2000, scoped, tag = 'output window, operand 0, single buffered']
    #allocation3 [shape = 's32[1]{0}', space=sflag, size = 0x4, scoped, tag = 'scoped memory for encoder_layer_forward.5']
    %12 = vsyncpa [#allocation3], 0
    // Predicated region
    $region2: #{encoder_layer_forward.5} parent=1 // pred_check
      _
    $region3: #{encoder_layer_forward.5} parent=1 // pred_check_branch
      %14 = sbr.rel (0) target = $region5
    $region4: #{encoder_layer_forward.5} parent=1 // pred_region
      _
    $region5: #{encoder_layer_forward.5} parent=1 // pred_fallthru
      _
    // Predicated region
    $region6: #{encoder_layer_forward.5} parent=1 // pred_check
      _
    $region7: #{encoder_layer_forward.5} parent=1 // pred_check_branch
      %16 = sbr.rel (0) target = $region9
    $region8: #{encoder_layer_forward.5} parent=1 // pred_region
      _
    $region9: #{encoder_layer_forward.5} parent=1 // pred_fallthru
      _
    // Predicated region
    $region10: #{encoder_layer_forward.5} parent=1 // pred_check
      _
    $region11: #{encoder_layer_forward.5} parent=1 // pred_check_branch
      %18 = sbr.rel (0) target = $region13
    $region12: #{encoder_layer_forward.5} parent=1 // pred_region
      _
    $region13: #{encoder_layer_forward.5} parent=1 // pred_fallthru
      _
    // Predicated region
    $region14: #{encoder_layer_forward.5} parent=1 // pred_check
      _
    $region15: #{encoder_layer_forward.5} parent=1 // pred_check_branch
      %20 = sbr.rel (0) target = $region17
    $region16: #{encoder_layer_forward.5} parent=1 // pred_region
      _
    $region17: #{encoder_layer_forward.5} parent=1 // pred_fallthru
      _
    // Predicated region
    $region18: #{encoder_layer_forward.5} parent=1 // pred_check
      _
    $region19: #{encoder_layer_forward.5} parent=1 // pred_check_branch
      %22 = sbr.rel (0) target = $region21
    $region20: #{encoder_layer_forward.5} parent=1 // pred_region
      _
    $region21: #{encoder_layer_forward.5} parent=1 // pred_fallthru
      _
    // Predicated region
    $region22: #{encoder_layer_forward.5} parent=1 // pred_check
      _
    $region23: #{encoder_layer_forward.5} parent=1 // pred_check_branch
      %24 = sbr.rel (0) target = $region25
    $region24: #{encoder_layer_forward.5} parent=1 // pred_region
      _
    $region25: #{encoder_layer_forward.5} parent=1 // pred_fallthru
      _
    // Predicated region
    $region26: #{encoder_layer_forward.5} parent=1 // pred_check
      _
    $region27: #{encoder_layer_forward.5} parent=1 // pred_check_branch
      %26 = sbr.rel (0) target = $region29
    $region28: #{encoder_layer_forward.5} parent=1 // pred_region
      _
    $region29: #{encoder_layer_forward.5} parent=1 // pred_fallthru
      _
    %v28 = vld [vmem:[%s0] sm:$0xff]
    %v29 = vld [vmem:[%s0 + $0x8] sm:$0xff]
    %v30 = vld [vmem:[%s1] sm:$0x1]
    %v31 = vld [vmem:[%s2] sm:$0x1]
    %vm32 = vcmask 261120
    %v33 = vsel %vm32, %v28, 0.0
    %34 = vadd.xlane.f32.xlu0 %v33
    %v35 = vpop.xlane.xlu0 %34
    %v36 = vsel %vm32, %v29, 0.0
    %37 = vadd.xlane.f32.xlu0 %v36
    %v38 = vpop.xlane.xlu0 %37
    %v39 = vrcp.pop 32.0
    %v40 = vmul.f32 32.0, %v39
    %v41 = vsub.f32 1.0, %v40
    %v42 = vmul.f32 %v39, %v41
    %v43 = vadd.f32 %v39, %v42
    %vm44 = vweird.f32 %v39
    %v45 = vsel %vm44, %v39, %v43
    %v46 = vmul.f32 %v35, %v45
    %v47 = vmul.f32 %v38, %v45
    %v48 = vsub.f32 %v28, %v46
    %v49 = vsub.f32 %v29, %v47
    %v50 = vmul.f32 %v48, %v48
    %v51 = vmul.f32 %v49, %v49
    %v52 = vsel %vm32, %v50, 0.0
    %53 = vadd.xlane.f32.xlu0 %v52
    %v54 = vpop.xlane.xlu0 %53
    %v55 = vsel %vm32, %v51, 0.0
    %56 = vadd.xlane.f32.xlu0 %v55
    %v57 = vpop.xlane.xlu0 %56
    %v58 = vmul.f32 %v54, 0.032258064
    %v59 = vmul.f32 %v57, 0.032258064
    %v60 = vrsqrt.pop %v58
    %v61 = vmul.f32 %v60, %v58
    %v62 = vmul.f32 %v61, %v60
    %v63 = vmul.f32 0.5, %v62
    %v64 = vsub.f32 1.5, %v63
    %v65 = vmul.f32 %v60, %v64
    %v66 = vmul.f32 %v58, %v65
    %vm67 = vcmp.eq.f32.partialorder %v58, inf
    %v68 = vsel %vm67, %v58, %v66
    %vm69 = vcmp.eq.f32.partialorder %v58, 0.0
    %v70 = vand.u32 %v58, 2147483648
    %v71 = vsel %vm69, %v70, %v68
    %v72 = vrsqrt.pop %v59
    %v73 = vmul.f32 %v72, %v59
    %v74 = vmul.f32 %v73, %v72
    %v75 = vmul.f32 0.5, %v74
    %v76 = vsub.f32 1.5, %v75
    %v77 = vmul.f32 %v72, %v76
    %v78 = vmul.f32 %v59, %v77
    %vm79 = vcmp.eq.f32.partialorder %v59, inf
    %v80 = vsel %vm79, %v59, %v78
    %vm81 = vcmp.eq.f32.partialorder %v59, 0.0
    %v82 = vand.u32 %v59, 2147483648
    %v83 = vsel %vm81, %v82, %v80
    %v84 = vadd.f32 %v71, 1e-06
    %v85 = vadd.f32 %v83, 1e-06
    %v86 = vrcp.pop %v84
    %v87 = vmul.f32 %v84, %v86
    %v88 = vsub.f32 1.0, %v87
    %v89 = vmul.f32 %v86, %v88
    %v90 = vadd.f32 %v86, %v89
    %vm91 = vweird.f32 %v84
    %vm92 = vweird.f32 %v86
    %vm93 = vmor %vm91, %vm92
    %v94 = vsel %vm93, %v86, %v90
    %v95 = vand.u32 2147483647, %v84
    %vm96 = vcmp.eq.f32.partialorder %v95, 8.507059e+37
    %v97 = vand.u32 %v84, 2147483648
    %v98 = vor.u32 1.1754944e-38, %v97
    %v99 = vsel %vm96, %v98, %v94
    %v100 = vmul.f32 %v48, %v99
    %v101 = vrcp.pop %v85
    %v102 = vmul.f32 %v85, %v101
    %v103 = vsub.f32 1.0, %v102
    %v104 = vmul.f32 %v101, %v103
    %v105 = vadd.f32 %v101, %v104
    %vm106 = vweird.f32 %v85
    %vm107 = vweird.f32 %v101
    %vm108 = vmor %vm106, %vm107
    %v109 = vsel %vm108, %v101, %v105
    %v110 = vand.u32 2147483647, %v85
    %vm111 = vcmp.eq.f32.partialorder %v110, 8.507059e+37
    %v112 = vand.u32 %v85, 2147483648
    %v113 = vor.u32 1.1754944e-38, %v112
    %v114 = vsel %vm111, %v113, %v109
    %v115 = vmul.f32 %v49, %v114
    %v117 = vperm.slane %v30, 0
    %v119 = vmul.f32 %v100, %v117
    %v120 = vmul.f32 %v115, %v117
    %v122 = vperm.slane %v31, 0
    %v124 = vadd.f32 %v119, %v122
    %v125 = vadd.f32 %v120, %v122
    %v126 = vpack.c.bf16 %v125, %v124
    %v127 = vld [vmem:[%s3] sm:$0xf]
    %v128 = vld [vmem:[%s3 + $0x4] sm:$0xf]
    %v129 = vld [vmem:[%s3 + $0x8] sm:$0xf]
    %v130 = vld [vmem:[%s3 + $0xc] sm:$0xf]
    %v131 = vld [vmem:[%s4] sm:$0x1]
    %v133 = vperm.slane %v131, 0
    %v139 = vunpack.c.l.b16 %v127
    %v140 = vunpack.c.l.b16 %v128
    %v141 = vunpack.c.l.b16 %v129
    %v142 = vunpack.c.l.b16 %v130
    %v143 = vpack.c.b16 %v140, %v139
    %v144 = vpack.c.b16 %v142, %v141
    %v148 = vsel %vm32, %v126, 0
    %150 = vmatpush.bf16.msra.mxu0 0
    %151 = vmatpush.bf16.msra.mxu0 0
    %152 = vmatpush.bf16.msra.mxu0 0
    %153 = vmatpush.bf16.msra.mxu0 0
    %154 = vmatpush.bf16.msra.mxu0 0
    %155 = vmatpush.bf16.msra.mxu0 0
    %156 = vmatpush.bf16.msra.mxu0 %v144
    %157 = vmatpush.bf16.msra.mxu0 %v143
    %158 = vmatmul.bf16.gmra.mxu0 %v148
    %v159 = vpop.f32.mrf.mxu0
    %v160 = vadd.f32 %v133, %v159
    %v161 = vpop.f32.mrf.mxu0
    %v162 = vadd.f32 %v133, %v161
    %163 = vdwg.mxu0
    %v164 = vmax.f32 %v160, 0.0
    %v165 = vmax.f32 %v162, 0.0
    %v166 = vpack.c.bf16 %v165, %v164
    %v167 = vld [vmem:[%s5] sm:$0xf]
    %v168 = vld [vmem:[%s5 + $0x4] sm:$0xf]
    %v169 = vld [vmem:[%s5 + $0x8] sm:$0xf]
    %v170 = vld [vmem:[%s5 + $0xc] sm:$0xf]
    %v171 = vld [vmem:[%s5 + $0x10] sm:$0xf]
    %v172 = vld [vmem:[%s5 + $0x14] sm:$0xf]
    %v173 = vld [vmem:[%s5 + $0x18] sm:$0xf]
    %v174 = vld [vmem:[%s5 + $0x1c] sm:$0xf]
    %v175 = vld [vmem:[%s6] sm:$0x1]
    %v177 = vperm.slane %v175, 0
    %v187 = vunpack.c.l.b16 %v167
    %v188 = vunpack.c.l.b16 %v168
    %v189 = vunpack.c.l.b16 %v169
    %v190 = vunpack.c.l.b16 %v170
    %v191 = vunpack.c.l.b16 %v171
    %v192 = vunpack.c.l.b16 %v172
    %v193 = vunpack.c.l.b16 %v173
    %v194 = vunpack.c.l.b16 %v174
    %v195 = vpack.c.b16 %v188, %v187
    %v196 = vpack.c.b16 %v190, %v189
    %v197 = vpack.c.b16 %v192, %v191
    %v198 = vpack.c.b16 %v194, %v193
    %vm203 = vcmask 523264
    %v205 = vsel %vm203, %v166, 0
    %207 = vmatpush.bf16.msra.mxu0 0
    %208 = vmatpush.bf16.msra.mxu0 0
    %209 = vmatpush.bf16.msra.mxu0 0
    %210 = vmatpush.bf16.msra.mxu0 0
    %211 = vmatpush.bf16.msra.mxu0 %v198
    %212 = vmatpush.bf16.msra.mxu0 %v197
    %213 = vmatpush.bf16.msra.mxu0 %v196
    %214 = vmatpush.bf16.msra.mxu0 %v195
    %215 = vmatmul.bf16.gmra.mxu0 %v205
    %v216 = vpop.f32.mrf.mxu0
    %v217 = vadd.f32 %v177, %v216
    %v218 = vpop.f32.mrf.mxu0
    %v219 = vadd.f32 %v177, %v218
    %220 = vdwg.mxu0
    %v221 = vadd.f32 %v28, %v217
    %v222 = vadd.f32 %v29, %v219
    %223 = vst.msk [vmem:[#allocation2] sm:$0xff] %vm32, %v221
    %224 = vst.msk [vmem:[#allocation2 + $0x8] sm:$0xff] %vm32, %v222
    // Predicated region
    $region30: #{encoder_layer_forward.5} parent=1 // pred_check
      _
    $region31: #{encoder_layer_forward.5} parent=1 // pred_check_branch
      %226 = sbr.rel (0) target = $region33
    $region32: #{encoder_layer_forward.5} parent=1 // pred_region
      %228 = vsyncadd [#allocation3], 0
      %s229 = sshll.u32 [#allocation2], 4
      %s230 = int_to_ptr.vmem [resolvable:$true] %s229
      %s231 = sshll.u32 %s7, 4
      %s232 = int_to_ptr.hbm [resolvable:$true] %s231
      %237 = dma.vmem_to_hbm [thread:$0]  %s230, 256, %s232, [#allocation3], 128, 128, 8
    $region33: #{encoder_layer_forward.5} parent=1 // pred_fallthru
      _
    // Predicated region
    $region34: #{encoder_layer_forward.5} parent=1 // pred_check
      _
    $region35: #{encoder_layer_forward.5} parent=1 // pred_check_branch
      %239 = sbr.rel (0) target = $region37
    $region36: #{encoder_layer_forward.5} parent=1 // pred_region
      %241 = dma.done [#allocation3], 256
    $region37: #{encoder_layer_forward.5} parent=1 // pred_fallthru
      _
    %242 = vsyncpa [#allocation3], 1

// kernel: encoder_layer_forward.3
$region0: #{encoder_layer_forward.3}
  #allocation0 [shape = 'u32[]', space=smem, size = 0x4, offset = 0x4, fixed_abs, tag = 'smem constant byte address 0x4 - core index']
  #allocation1 [shape = 'u32[72,128]{1,0:T(1,128)}', space=vmem, size = 0x9000, scoped, tag = 'internal scratch']
  %s0 = inlined_call_operand.hbm [shape: f32[16,32], index: 0, kind: input, shape index: {}]
  %s1 = inlined_call_operand.hbm [shape: f32[1,32], index: 1, kind: input, shape index: {}]
  %s2 = inlined_call_operand.hbm [shape: f32[1,32], index: 2, kind: input, shape index: {}]
  %s3 = inlined_call_operand.hbm [shape: bf16[32,32], index: 3, kind: input, shape index: {}]
  %s4 = inlined_call_operand.hbm [shape: bf16[32,32], index: 4, kind: input, shape index: {}]
  %s5 = inlined_call_operand.hbm [shape: bf16[32,32], index: 5, kind: input, shape index: {}]
  %s6 = inlined_call_operand.hbm [shape: f32[1,32], index: 6, kind: input, shape index: {}]
  %s7 = inlined_call_operand.hbm [shape: f32[1,32], index: 7, kind: input, shape index: {}]
  %s8 = inlined_call_operand.hbm [shape: f32[1,32], index: 8, kind: input, shape index: {}]
  %s9 = inlined_call_operand.vmem [shape: bf16[16,32], index: 9, kind: output, shape index: {0}]
  %s10 = inlined_call_operand.vmem [shape: bf16[16,32], index: 10, kind: output, shape index: {1}]
  %s11 = inlined_call_operand.vmem [shape: bf16[16,32], index: 11, kind: output, shape index: {2}]
  %12 = xla_tuple %s9, %s10, %s11
  %s13 = sld [smem:[#allocation0]]
  $region98: #{encoder_layer_forward.3} parent=0
    _
  %s15 = ssub.s32 1, %s13
  %s16 = scalar_select 0, %s15, %s13
  $region1: #{encoder_layer_forward.3} parent=0
    #allocation2 [shape = 'u8[8192]{0}', space=vmem, size = 0x2000, scoped, tag = 'input window, operand 0, single buffered']
    #allocation3 [shape = 's32[1]{0}', space=sflag, size = 0x4, scoped, tag = 'scoped memory for encoder_layer_forward.3']
    #allocation4 [shape = 'u8[512]{0}', space=vmem, size = 0x400, scoped, tag = 'input window, operand 1, single buffered']
    #allocation5 [shape = 's32[1]{0}', space=sflag, size = 0x4, scoped, tag = 'scoped memory for encoder_layer_forward.3']
    #allocation6 [shape = 'u8[512]{0}', space=vmem, size = 0x400, scoped, tag = 'input window, operand 2, single buffered']
    #allocation7 [shape = 'u8[8192]{0}', space=vmem, size = 0x2000, scoped, tag = 'input window, operand 3, single buffered']
    #allocation8 [shape = 's32[1]{0}', space=sflag, size = 0x4, scoped, tag = 'scoped memory for encoder_layer_forward.3']
    #allocation9 [shape = 'u8[8192]{0}', space=vmem, size = 0x2000, scoped, tag = 'input window, operand 4, single buffered']
    #allocation10 [shape = 'u8[8192]{0}', space=vmem, size = 0x2000, scoped, tag = 'input window, operand 5, single buffered']
    #allocation11 [shape = 's32[1]{0}', space=sflag, size = 0x4, scoped, tag = 'scoped memory for encoder_layer_forward.3']
    #allocation12 [shape = 'u8[512]{0}', space=vmem, size = 0x400, scoped, tag = 'input window, operand 6, single buffered']
    #allocation13 [shape = 'u8[512]{0}', space=vmem, size = 0x400, scoped, tag = 'input window, operand 7, single buffered']
    #allocation14 [shape = 's32[1]{0}', space=sflag, size = 0x4, scoped, tag = 'scoped memory for encoder_layer_forward.3']
    #allocation15 [shape = 'u8[512]{0}', space=vmem, size = 0x400, scoped, tag = 'input window, operand 8, single buffered']
    %17 = vsyncpa [#allocation3], 0
    %18 = vsyncpa [#allocation5], 0
    %19 = vsyncpa [#allocation8], 0
    %20 = vsyncpa [#allocation11], 0
    %21 = vsyncpa [#allocation14], 0
    // Predicated region
    $region2: #{encoder_layer_forward.3} parent=1 // pred_check
      _
    $region3: #{encoder_layer_forward.3} parent=1 // pred_check_branch
      %23 = sbr.rel (0) target = $region5
    $region4: #{encoder_layer_forward.3} parent=1 // pred_region
      %25 = vsyncadd [#allocation3], 0
      %s26 = sshll.u32 %s0, 4
      %s27 = int_to_ptr.hbm [resolvable:$true] %s26
      %s28 = sshll.u32 [#allocation2], 4
      %s29 = int_to_ptr.vmem [resolvable:$true] %s28
      %34 = dma.hbm_to_vmem [thread:$0]  %s27, 256, %s29, [#allocation3], 128, 128, 8
    $region5: #{encoder_layer_forward.3} parent=1 // pred_fallthru
      _
    // Predicated region
    $region6: #{encoder_layer_forward.3} parent=1 // pred_check
      _
    $region7: #{encoder_layer_forward.3} parent=1 // pred_check_branch
      %36 = sbr.rel (0) target = $region9
    $region8: #{encoder_layer_forward.3} parent=1 // pred_region
      %38 = vsyncadd [#allocation5], 0
      %s40 = sshll.u32 %s1, 4
      %s41 = int_to_ptr.hbm [resolvable:$true] %s40
      %s42 = sshll.u32 [#allocation4], 4
      %s43 = int_to_ptr.vmem [resolvable:$true] %s42
      %45 = dma.hbm_to_vmem [thread:$0]  %s41, 16, %s43, [#allocation5]
    $region9: #{encoder_layer_forward.3} parent=1 // pred_fallthru
      _
    // Predicated region
    $region10: #{encoder_layer_forward.3} parent=1 // pred_check
      _
    $region11: #{encoder_layer_forward.3} parent=1 // pred_check_branch
      %47 = sbr.rel (0) target = $region13
    $region12: #{encoder_layer_forward.3} parent=1 // pred_region
      %49 = vsyncadd [#allocation5], 0
      %s51 = sshll.u32 %s2, 4
      %s52 = int_to_ptr.hbm [resolvable:$true] %s51
      %s53 = sshll.u32 [#allocation6], 4
      %s54 = int_to_ptr.vmem [resolvable:$true] %s53
      %56 = dma.hbm_to_vmem [thread:$0]  %s52, 16, %s54, [#allocation5]
    $region13: #{encoder_layer_forward.3} parent=1 // pred_fallthru
      _
    // Predicated region
    $region14: #{encoder_layer_forward.3} parent=1 // pred_check
      _
    $region15: #{encoder_layer_forward.3} parent=1 // pred_check_branch
      %58 = sbr.rel (0) target = $region17
    $region16: #{encoder_layer_forward.3} parent=1 // pred_region
      %60 = vsyncadd [#allocation8], 0
      %s61 = sshll.u32 %s3, 4
      %s62 = int_to_ptr.hbm [resolvable:$true] %s61
      %s63 = sshll.u32 [#allocation7], 4
      %s64 = int_to_ptr.vmem [resolvable:$true] %s63
      %69 = dma.hbm_to_vmem [thread:$0]  %s62, 256, %s64, [#allocation8], 64, 64, 4
    $region17: #{encoder_layer_forward.3} parent=1 // pred_fallthru
      _
    // Predicated region
    $region18: #{encoder_layer_forward.3} parent=1 // pred_check
      _
    $region19: #{encoder_layer_forward.3} parent=1 // pred_check_branch
      %71 = sbr.rel (0) target = $region21
    $region20: #{encoder_layer_forward.3} parent=1 // pred_region
      %73 = vsyncadd [#allocation8], 0
      %s74 = sshll.u32 %s4, 4
      %s75 = int_to_ptr.hbm [resolvable:$true] %s74
      %s76 = sshll.u32 [#allocation9], 4
      %s77 = int_to_ptr.vmem [resolvable:$true] %s76
      %82 = dma.hbm_to_vmem [thread:$0]  %s75, 256, %s77, [#allocation8], 64, 64, 4
    $region21: #{encoder_layer_forward.3} parent=1 // pred_fallthru
      _
    // Predicated region
    $region22: #{encoder_layer_forward.3} parent=1 // pred_check
      _
    $region23: #{encoder_layer_forward.3} parent=1 // pred_check_branch
      %84 = sbr.rel (0) target = $region25
    $region24: #{encoder_layer_forward.3} parent=1 // pred_region
      %86 = vsyncadd [#allocation11], 0
      %s87 = sshll.u32 %s5, 4
      %s88 = int_to_ptr.hbm [resolvable:$true] %s87
      %s89 = sshll.u32 [#allocation10], 4
      %s90 = int_to_ptr.vmem [resolvable:$true] %s89
      %95 = dma.hbm_to_vmem [thread:$0]  %s88, 256, %s90, [#allocation11], 64, 64, 4
    $region25: #{encoder_layer_forward.3} parent=1 // pred_fallthru
      _
    // Predicated region
    $region26: #{encoder_layer_forward.3} parent=1 // pred_check
      _
    $region27: #{encoder_layer_forward.3} parent=1 // pred_check_branch
      %97 = sbr.rel (0) target = $region29
    $region28: #{encoder_layer_forward.3} parent=1 // pred_region
      %99 = vsyncadd [#allocation11], 0
      %s101 = sshll.u32 %s6, 4
      %s102 = int_to_ptr.hbm [resolvable:$true] %s101
      %s103 = sshll.u32 [#allocation12], 4
      %s104 = int_to_ptr.vmem [resolvable:$true] %s103
      %106 = dma.hbm_to_vmem [thread:$0]  %s102, 16, %s104, [#allocation11]
    $region29: #{encoder_layer_forward.3} parent=1 // pred_fallthru
      _
    // Predicated region
    $region30: #{encoder_layer_forward.3} parent=1 // pred_check
      _
    $region31: #{encoder_layer_forward.3} parent=1 // pred_check_branch
      %108 = sbr.rel (0) target = $region33
    $region32: #{encoder_layer_forward.3} parent=1 // pred_region
      %110 = vsyncadd [#allocation14], 0
      %s112 = sshll.u32 %s7, 4
      %s113 = int_to_ptr.hbm [resolvable:$true] %s112
      %s114 = sshll.u32 [#allocation13], 4
      %s115 = int_to_ptr.vmem [resolvable:$true] %s114
      %117 = dma.hbm_to_vmem [thread:$0]  %s113, 16, %s115, [#allocation14]
    $region33: #{encoder_layer_forward.3} parent=1 // pred_fallthru
      _
    // Predicated region
    $region34: #{encoder_layer_forward.3} parent=1 // pred_check
      _
    $region35: #{encoder_layer_forward.3} parent=1 // pred_check_branch
      %119 = sbr.rel (0) target = $region37
    $region36: #{encoder_layer_forward.3} parent=1 // pred_region
      %121 = vsyncadd [#allocation14], 0
      %s123 = sshll.u32 %s8, 4
      %s124 = int_to_ptr.hbm [resolvable:$true] %s123
      %s125 = sshll.u32 [#allocation15], 4
      %s126 = int_to_ptr.vmem [resolvable:$true] %s125
      %128 = dma.hbm_to_vmem [thread:$0]  %s124, 16, %s126, [#allocation14]
    $region37: #{encoder_layer_forward.3} parent=1 // pred_fallthru
      _
    // Predicated region
    $region38: #{encoder_layer_forward.3} parent=1 // pred_check
      _
    $region39: #{encoder_layer_forward.3} parent=1 // pred_check_branch
      %130 = sbr.rel (0) target = $region41
    $region40: #{encoder_layer_forward.3} parent=1 // pred_region
      %132 = dma.done [#allocation3], 256
    $region41: #{encoder_layer_forward.3} parent=1 // pred_fallthru
      _
    // Predicated region
    $region42: #{encoder_layer_forward.3} parent=1 // pred_check
      _
    $region43: #{encoder_layer_forward.3} parent=1 // pred_check_branch
      %134 = sbr.rel (0) target = $region45
    $region44: #{encoder_layer_forward.3} parent=1 // pred_region
      %136 = dma.done [#allocation5], 16
    $region45: #{encoder_layer_forward.3} parent=1 // pred_fallthru
      _
    // Predicated region
    $region46: #{encoder_layer_forward.3} parent=1 // pred_check
      _
    $region47: #{encoder_layer_forward.3} parent=1 // pred_check_branch
      %138 = sbr.rel (0) target = $region49
    $region48: #{encoder_layer_forward.3} parent=1 // pred_region
      %140 = dma.done [#allocation5], 16
    $region49: #{encoder_layer_forward.3} parent=1 // pred_fallthru
      _
    // Predicated region
    $region50: #{encoder_layer_forward.3} parent=1 // pred_check
      _
    $region51: #{encoder_layer_forward.3} parent=1 // pred_check_branch
      %142 = sbr.rel (0) target = $region53
    $region52: #{encoder_layer_forward.3} parent=1 // pred_region
      %144 = dma.done [#allocation8], 256
    $region53: #{encoder_layer_forward.3} parent=1 // pred_fallthru
      _
    // Predicated region
    $region54: #{encoder_layer_forward.3} parent=1 // pred_check
      _
    $region55: #{encoder_layer_forward.3} parent=1 // pred_check_branch
      %146 = sbr.rel (0) target = $region57
    $region56: #{encoder_layer_forward.3} parent=1 // pred_region
      %148 = dma.done [#allocation8], 256
    $region57: #{encoder_layer_forward.3} parent=1 // pred_fallthru
      _
    // Predicated region
    $region58: #{encoder_layer_forward.3} parent=1 // pred_check
      _
    $region59: #{encoder_layer_forward.3} parent=1 // pred_check_branch
      %150 = sbr.rel (0) target = $region61
    $region60: #{encoder_layer_forward.3} parent=1 // pred_region
      %152 = dma.done [#allocation11], 256
    $region61: #{encoder_layer_forward.3} parent=1 // pred_fallthru
      _
    // Predicated region
    $region62: #{encoder_layer_forward.3} parent=1 // pred_check
      _
    $region63: #{encoder_layer_forward.3} parent=1 // pred_check_branch
      %154 = sbr.rel (0) target = $region65
    $region64: #{encoder_layer_forward.3} parent=1 // pred_region
      %156 = dma.done [#allocation11], 16
    $region65: #{encoder_layer_forward.3} parent=1 // pred_fallthru
      _
    // Predicated region
    $region66: #{encoder_layer_forward.3} parent=1 // pred_check
      _
    $region67: #{encoder_layer_forward.3} parent=1 // pred_check_branch
      %158 = sbr.rel (0) target = $region69
    $region68: #{encoder_layer_forward.3} parent=1 // pred_region
      %160 = dma.done [#allocation14], 16
    $region69: #{encoder_layer_forward.3} parent=1 // pred_fallthru
      _
    // Predicated region
    $region70: #{encoder_layer_forward.3} parent=1 // pred_check
      _
    $region71: #{encoder_layer_forward.3} parent=1 // pred_check_branch
      %162 = sbr.rel (0) target = $region73
    $region72: #{encoder_layer_forward.3} parent=1 // pred_region
      %164 = dma.done [#allocation14], 16
    $region73: #{encoder_layer_forward.3} parent=1 // pred_fallthru
      _
    %v166 = vld [vmem:[#allocation2] sm:$0xff]
    %v167 = vld [vmem:[#allocation2 + $0x8] sm:$0xff]
    %v168 = vld [vmem:[#allocation4] sm:$0x1]
    %v169 = vld [vmem:[#allocation6] sm:$0x1]
    %vm170 = vcmask 261120
    %v171 = vsel %vm170, %v166, 0.0
    %172 = vadd.xlane.f32.xlu0 %v171
    %v173 = vpop.xlane.xlu0 %172
    %v174 = vsel %vm170, %v167, 0.0
    %175 = vadd.xlane.f32.xlu0 %v174
    %v176 = vpop.xlane.xlu0 %175
    %v177 = vrcp.pop 32.0
    %v178 = vmul.f32 32.0, %v177
    %v179 = vsub.f32 1.0, %v178
    %v180 = vmul.f32 %v177, %v179
    %v181 = vadd.f32 %v177, %v180
    %vm182 = vweird.f32 %v177
    %v183 = vsel %vm182, %v177, %v181
    %v184 = vmul.f32 %v173, %v183
    %v185 = vmul.f32 %v176, %v183
    %v186 = vsub.f32 %v166, %v184
    %v187 = vsub.f32 %v167, %v185
    %v188 = vmul.f32 %v186, %v186
    %v189 = vmul.f32 %v187, %v187
    %v190 = vsel %vm170, %v188, 0.0
    %191 = vadd.xlane.f32.xlu0 %v190
    %v192 = vpop.xlane.xlu0 %191
    %v193 = vsel %vm170, %v189, 0.0
    %194 = vadd.xlane.f32.xlu0 %v193
    %v195 = vpop.xlane.xlu0 %194
    %v196 = vmul.f32 %v192, 0.032258064
    %v197 = vmul.f32 %v195, 0.032258064
    %v198 = vrsqrt.pop %v196
    %v199 = vmul.f32 %v198, %v196
    %v200 = vmul.f32 %v199, %v198
    %v201 = vmul.f32 0.5, %v200
    %v202 = vsub.f32 1.5, %v201
    %v203 = vmul.f32 %v198, %v202
    %v204 = vmul.f32 %v196, %v203
    %vm205 = vcmp.eq.f32.partialorder %v196, inf
    %v206 = vsel %vm205, %v196, %v204
    %vm207 = vcmp.eq.f32.partialorder %v196, 0.0
    %v208 = vand.u32 %v196, 2147483648
    %v209 = vsel %vm207, %v208, %v206
    %v210 = vrsqrt.pop %v197
    %v211 = vmul.f32 %v210, %v197
    %v212 = vmul.f32 %v211, %v210
    %v213 = vmul.f32 0.5, %v212
    %v214 = vsub.f32 1.5, %v213
    %v215 = vmul.f32 %v210, %v214
    %v216 = vmul.f32 %v197, %v215
    %vm217 = vcmp.eq.f32.partialorder %v197, inf
    %v218 = vsel %vm217, %v197, %v216
    %vm219 = vcmp.eq.f32.partialorder %v197, 0.0
    %v220 = vand.u32 %v197, 2147483648
    %v221 = vsel %vm219, %v220, %v218
    %v222 = vadd.f32 %v209, 1e-06
    %v223 = vadd.f32 %v221, 1e-06
    %v224 = vrcp.pop %v222
    %v225 = vmul.f32 %v222, %v224
    %v226 = vsub.f32 1.0, %v225
    %v227 = vmul.f32 %v224, %v226
    %v228 = vadd.f32 %v224, %v227
    %vm229 = vweird.f32 %v222
    %vm230 = vweird.f32 %v224
    %vm231 = vmor %vm229, %vm230
    %v232 = vsel %vm231, %v224, %v228
    %v233 = vand.u32 2147483647, %v222
    %vm234 = vcmp.eq.f32.partialorder %v233, 8.507059e+37
    %v235 = vand.u32 %v222, 2147483648
    %v236 = vor.u32 1.1754944e-38, %v235
    %v237 = vsel %vm234, %v236, %v232
    %v238 = vmul.f32 %v186, %v237
    %v239 = vrcp.pop %v223
    %v240 = vmul.f32 %v223, %v239
    %v241 = vsub.f32 1.0, %v240
    %v242 = vmul.f32 %v239, %v241
    %v243 = vadd.f32 %v239, %v242
    %vm244 = vweird.f32 %v223
    %vm245 = vweird.f32 %v239
    %vm246 = vmor %vm244, %vm245
    %v247 = vsel %vm246, %v239, %v243
    %v248 = vand.u32 2147483647, %v223
    %vm249 = vcmp.eq.f32.partialorder %v248, 8.507059e+37
    %v250 = vand.u32 %v223, 2147483648
    %v251 = vor.u32 1.1754944e-38, %v250
    %v252 = vsel %vm249, %v251, %v247
    %v253 = vmul.f32 %v187, %v252
    %v255 = vperm.slane %v168, 0
    %v257 = vmul.f32 %v238, %v255
    %v258 = vmul.f32 %v253, %v255
    %v260 = vperm.slane %v169, 0
    %v262 = vadd.f32 %v257, %v260
    %v263 = vadd.f32 %v258, %v260
    %v264 = vpack.c.bf16 %v263, %v262
    %v265 = vld [vmem:[#allocation7] sm:$0xf]
    %v266 = vld [vmem:[#allocation7 + $0x4] sm:$0xf]
    %v267 = vld [vmem:[#allocation7 + $0x8] sm:$0xf]
    %v268 = vld [vmem:[#allocation7 + $0xc] sm:$0xf]
    %v269 = vld [vmem:[#allocation12] sm:$0x1]
    %v271 = vperm.slane %v269, 0
    %v277 = vunpack.c.l.b16 %v265
    %v278 = vunpack.c.l.b16 %v266
    %v279 = vunpack.c.l.b16 %v267
    %v280 = vunpack.c.l.b16 %v268
    %v281 = vpack.c.b16 %v278, %v277
    %v282 = vpack.c.b16 %v280, %v279
    %v286 = vsel %vm170, %v264, 0
    %288 = vmatpush.bf16.msra.mxu0 0
    %289 = vmatpush.bf16.msra.mxu0 0
    %290 = vmatpush.bf16.msra.mxu0 0
    %291 = vmatpush.bf16.msra.mxu0 0
    %292 = vmatpush.bf16.msra.mxu0 0
    %293 = vmatpush.bf16.msra.mxu0 0
    %294 = vmatpush.bf16.msra.mxu0 %v282
    %295 = vmatpush.bf16.msra.mxu0 %v281
    %296 = vmatmul.bf16.gmra.mxu0 %v286
    %v297 = vpop.f32.mrf.mxu0
    %v298 = vadd.f32 %v271, %v297
    %v299 = vpop.f32.mrf.mxu0
    %v300 = vadd.f32 %v271, %v299
    %301 = vdwg.mxu0
    %v302 = vld [vmem:[#allocation9] sm:$0xf]
    %v303 = vld [vmem:[#allocation9 + $0x4] sm:$0xf]
    %v304 = vld [vmem:[#allocation9 + $0x8] sm:$0xf]
    %v305 = vld [vmem:[#allocation9 + $0xc] sm:$0xf]
    %v306 = vld [vmem:[#allocation13] sm:$0x1]
    %v308 = vperm.slane %v306, 0
    %v314 = vunpack.c.l.b16 %v302
    %v315 = vunpack.c.l.b16 %v303
    %v316 = vunpack.c.l.b16 %v304
    %v317 = vunpack.c.l.b16 %v305
    %v318 = vpack.c.b16 %v315, %v314
    %v319 = vpack.c.b16 %v317, %v316
    %322 = vmatpush.bf16.msra.mxu0 0
    %323 = vmatpush.bf16.msra.mxu0 0
    %324 = vmatpush.bf16.msra.mxu0 0
    %325 = vmatpush.bf16.msra.mxu0 0
    %326 = vmatpush.bf16.msra.mxu0 0
    %327 = vmatpush.bf16.msra.mxu0 0
    %328 = vmatpush.bf16.msra.mxu0 %v319
    %329 = vmatpush.bf16.msra.mxu0 %v318
    %330 = vmatmul.bf16.gmra.mxu0 %v286
    %v331 = vpop.f32.mrf.mxu0
    %v332 = vadd.f32 %v308, %v331
    %v333 = vpop.f32.mrf.mxu0
    %v334 = vadd.f32 %v308, %v333
    %335 = vdwg.mxu0
    %v336 = vld [vmem:[#allocation10] sm:$0xf]
    %v337 = vld [vmem:[#allocation10 + $0x4] sm:$0xf]
    %v338 = vld [vmem:[#allocation10 + $0x8] sm:$0xf]
    %v339 = vld [vmem:[#allocation10 + $0xc] sm:$0xf]
    %v340 = vld [vmem:[#allocation15] sm:$0x1]
    %v342 = vperm.slane %v340, 0
    %v348 = vunpack.c.l.b16 %v336
    %v349 = vunpack.c.l.b16 %v337
    %v350 = vunpack.c.l.b16 %v338
    %v351 = vunpack.c.l.b16 %v339
    %v352 = vpack.c.b16 %v349, %v348
    %v353 = vpack.c.b16 %v351, %v350
    %356 = vmatpush.bf16.msra.mxu0 0
    %357 = vmatpush.bf16.msra.mxu0 0
    %358 = vmatpush.bf16.msra.mxu0 0
    %359 = vmatpush.bf16.msra.mxu0 0
    %360 = vmatpush.bf16.msra.mxu0 0
    %361 = vmatpush.bf16.msra.mxu0 0
    %362 = vmatpush.bf16.msra.mxu0 %v353
    %363 = vmatpush.bf16.msra.mxu0 %v352
    %364 = vmatmul.bf16.gmra.mxu0 %v286
    %v365 = vpop.f32.mrf.mxu0
    %v366 = vadd.f32 %v342, %v365
    %v367 = vpop.f32.mrf.mxu0
    %v368 = vadd.f32 %v342, %v367
    %369 = vdwg.mxu0
    %v370 = vmul.f32 %v298, 0.35355338
    %v371 = vmul.f32 %v300, 0.35355338
    %v372 = vpack.c.bf16 %v370, %v370
    %v373 = vpack.c.bf16 %v371, %v371
    %vm374 = vcmask 257024
    %375 = vst.msk [vmem:[%s9] sm:$0xf] %vm374, %v372
    %376 = vst.msk [vmem:[%s9 + $0x4] sm:$0xf] %vm374, %v373
    %v377 = vpack.c.bf16 %v332, %v332
    %v378 = vpack.c.bf16 %v334, %v334
    %379 = vst.msk [vmem:[%s10] sm:$0xf] %vm374, %v377
    %380 = vst.msk [vmem:[%s10 + $0x4] sm:$0xf] %vm374, %v378
    %v381 = vpack.c.bf16 %v366, %v366
    %v382 = vpack.c.bf16 %v368, %v368
    %383 = vst.msk [vmem:[%s11] sm:$0xf] %vm374, %v381
    %384 = vst.msk [vmem:[%s11 + $0x4] sm:$0xf] %vm374, %v382
    // Predicated region
    $region74: #{encoder_layer_forward.3} parent=1 // pred_check
      _
    $region75: #{encoder_layer_forward.3} parent=1 // pred_check_branch
      %386 = sbr.rel (0) target = $region77
    $region76: #{encoder_layer_forward.3} parent=1 // pred_region
      _
    $region77: #{encoder_layer_forward.3} parent=1 // pred_fallthru
      _
    // Predicated region
    $region78: #{encoder_layer_forward.3} parent=1 // pred_check
      _
    $region79: #{encoder_layer_forward.3} parent=1 // pred_check_branch
      %388 = sbr.rel (0) target = $region81
    $region80: #{encoder_layer_forward.3} parent=1 // pred_region
      _
    $region81: #{encoder_layer_forward.3} parent=1 // pred_fallthru
      _
    // Predicated region
    $region82: #{encoder_layer_forward.3} parent=1 // pred_check
      _
    $region83: #{encoder_layer_forward.3} parent=1 // pred_check_branch
      %390 = sbr.rel (0) target = $region85
    $region84: #{encoder_layer_forward.3} parent=1 // pred_region
      _
    $region85: #{encoder_layer_forward.3} parent=1 // pred_fallthru
      _
    // Predicated region
    $region86: #{encoder_layer_forward.3} parent=1 // pred_check
      _
    $region87: #{encoder_layer_forward.3} parent=1 // pred_check_branch
      %392 = sbr.rel (0) target = $region89
    $region88: #{encoder_layer_forward.3} parent=1 // pred_region
      _
    $region89: #{encoder_layer_forward.3} parent=1 // pred_fallthru
      _
    // Predicated region
    $region90: #{encoder_layer_forward.3} parent=1 // pred_check
      _
    $region91: #{encoder_layer_forward.3} parent=1 // pred_check_branch
      %394 = sbr.rel (0) target = $region93
    $region92: #{encoder_layer_forward.3} parent=1 // pred_region
      _
    $region93: #{encoder_layer_forward.3} parent=1 // pred_fallthru
      _
    // Predicated region
    $region94: #{encoder_layer_forward.3} parent=1 // pred_check
      _
    $region95: #{encoder_layer_forward.3} parent=1 // pred_check_branch
      %396 = sbr.rel (0) target = $region97
    $region96: #{encoder_layer_forward.3} parent=1 // pred_region
      _
    $region97: #{encoder_layer_forward.3} parent=1 // pred_fallthru
      _
    %397 = vsyncpa [#allocation3], 1
    %398 = vsyncpa [#allocation5], 1
    %399 = vsyncpa [#allocation8], 1
    %400 = vsyncpa [#allocation11], 1
    %401 = vsyncpa [#allocation14], 1

// kernel: encoder_layer_forward.4
$region0: #{encoder_layer_forward.4}
  #allocation0 [shape = 'u32[]', space=smem, size = 0x4, offset = 0x4, fixed_abs, tag = 'smem constant byte address 0x4 - core index']
  #allocation1 [shape = 'u32[72,128]{1,0:T(1,128)}', space=vmem, size = 0x9000, scoped, tag = 'internal scratch']
  #allocation2 [shape = 'bf16[8,32]{1,0:T(8,128)(2,1)}', space=vmem, size = 0x800, scoped, tag = 'scratch operand']
  %s0 = inlined_call_operand.vmem [shape: bf16[2,8,32], index: 0, kind: input, shape index: {}]
  %s1 = inlined_call_operand.vmem [shape: bf16[2,8,32], index: 1, kind: input, shape index: {}]
  %s2 = inlined_call_operand.vmem [shape: bf16[2,8,32], index: 2, kind: input, shape index: {}]
  %s3 = inlined_call_operand.vmem [shape: s32[2,1,8], index: 3, kind: input, shape index: {}]
  %s4 = inlined_call_operand.hbm [shape: f32[2,8,32], index: 4, kind: input, shape index: {}]
  %s5 = inlined_call_operand.hbm [shape: bf16[32,32], index: 5, kind: input, shape index: {}]
  %s6 = inlined_call_operand.hbm [shape: f32[1,32], index: 6, kind: input, shape index: {}]
  %s7 = inlined_call_operand.vmem [shape: f32[2,8,32], index: 7, kind: output, shape index: {}]
  %s8 = sld [smem:[#allocation0]]
  $region73: #{encoder_layer_forward.4} parent=0
    _
  %s10 = ssub.s32 1, %s8
  %s11 = scalar_select 0, %s10, %s8
  $region1: #{encoder_layer_forward.4} parent=0
    #allocation3 [shape = 'u8[8192]{0}', space=vmem, size = 0x2000, scoped, tag = 'input window, operand 4']
    #allocation4 [shape = 's32[2]{0}', space=sflag, size = 0x8, scoped, tag = 'scoped memory for encoder_layer_forward.4']
    #allocation5 [shape = 'u8[8192]{0}', space=vmem, size = 0x2000, scoped, tag = 'input window, operand 5, single buffered']
    #allocation6 [shape = 's32[1]{0}', space=sflag, size = 0x4, scoped, tag = 'scoped memory for encoder_layer_forward.4']
    #allocation7 [shape = 'u8[512]{0}', space=vmem, size = 0x400, scoped, tag = 'input window, operand 6, single buffered']
    %12 = vsyncpa [#allocation4], 0
    %s13 = scalar_lea.sflag [#allocation4], 1
    %14 = vsyncpa %s13, 0
    %15 = vsyncpa [#allocation6], 0
    loop: start=0, step=1, limit=4
    $region2: #{encoder_layer_forward.4} parent=1 // loop_pre_header
      _
    $region3: #{encoder_layer_forward.4} parent=1 // loop_header
      %s17 = sphi 0, %s21
      %p18 = scmp.ge.s32.totalorder %s17, 4
      %s24 = sphi 0, %s36
      %s25 = sphi 0, %s32
      %s26 = sphi 0, %s24
      %s27 = sphi 0, %s25
      %s28 = sphi 0, %s26
      %s29 = sphi 0, %s27
      %s41 = sphi 0, %s43
      %s44 = sphi 0, %s41
      %s45 = sphi 0, %s44
      %s61 = sphi 0, %s45
      %s67 = sphi 0, %s69
      %s70 = sphi 0, %s67
      %s71 = sphi 0, %s70
      %s87 = sphi 0, %s71
      %s93 = sphi 0, %s95
      %s96 = sphi 0, %s93
      %s97 = sphi 0, %s96
      %s113 = sphi 0, %s97
      %s119 = sphi 0, %s121
      %s122 = sphi 0, %s119
      %s123 = sphi 0, %s122
      %s139 = sphi 0, %s123
      %s147 = sphi 0, %s149
      %s150 = sphi 0, %s147
      %s151 = sphi 0, %s150
      %s167 = sphi 0, %s151
      %s171 = sphi 0, %s171
      %s173 = sphi 0, %s171
      %s174 = sphi 0, %s173
      %s188 = sphi 0, %s174
      %s192 = sphi 0, %s192
      %s194 = sphi 0, %s192
      %s195 = sphi 0, %s194
      %s209 = sphi 0, %s195
      %s217 = sphi 0, %s219
      %s220 = sphi 0, %s217
      %s221 = sphi 0, %s220
      %s237 = sphi 0, %s221
    $region4: #{encoder_layer_forward.4} parent=1 // loop_header_branch
      %20 = sbr.rel (%p18) target = $region8
    $region5: #{encoder_layer_forward.4} parent=1 // loop_body
      %s22 = ssub.s32 %s17, 1
      %s23 = ssub.s32 %s17, 2
      %s30 = sadd.s32 1, %s25
      %p31 = scmp.ge.s32.totalorder %s30, 1
      %s32 = scalar_select %p31, 0, %s30
      %s33 = sadd.s32 1, %s24
      %s34 = scalar_select %p31, %s33, %s24
      %p35 = scmp.ge.s32.totalorder %s34, 2
      %s36 = scalar_select %p35, 0, %s34
      %s37 = ssub.s32 %s24, %s36
      %s38 = ssub.s32 %s25, %s32
      %s39 = sor.u32 %s37, %s38
      %p40 = scmp.eq.s32.totalorder %s39, 0
      %s42 = sadd.s32 %s41, 1
      %s43 = scalar_select %p40, %s41, %s42
      %p46 = pneg %p40
      %p47 = scmp.eq.s32.totalorder %s17, 1
      %p48 = por %p46, %p47
      %p49 = scmp.ne.s32.totalorder %s41, %s44
      %p50 = scmp.eq.s32.totalorder %s17, 0
      %p51 = por %p49, %p50
      %p52 = scmp.ne.s32.totalorder %s41, %s44
      %p53 = scmp.eq.s32.totalorder %s22, 1
      %p54 = por %p52, %p53
      %p55 = scmp.ne.s32.totalorder %s44, %s45
      %p56 = scmp.eq.s32.totalorder %s22, 0
      %p57 = por %p55, %p56
      %p58 = scmp.ne.s32.totalorder %s44, %s45
      %p59 = scmp.eq.s32.totalorder %s23, 1
      %p60 = por %p58, %p59
      %p62 = scmp.ne.s32.totalorder %s45, %s61
      %p63 = scmp.eq.s32.totalorder %s23, 0
      %p64 = por %p62, %p63
      %s65 = ssub.s32 %s24, %s36
      %p66 = scmp.eq.s32.totalorder %s65, 0
      %s68 = sadd.s32 %s67, 1
      %s69 = scalar_select %p66, %s67, %s68
      %p72 = pneg %p66
      %p73 = scmp.eq.s32.totalorder %s17, 1
      %p74 = por %p72, %p73
      %p75 = scmp.ne.s32.totalorder %s67, %s70
      %p76 = scmp.eq.s32.totalorder %s17, 0
      %p77 = por %p75, %p76
      %p78 = scmp.ne.s32.totalorder %s67, %s70
      %p79 = scmp.eq.s32.totalorder %s22, 1
      %p80 = por %p78, %p79
      %p81 = scmp.ne.s32.totalorder %s70, %s71
      %p82 = scmp.eq.s32.totalorder %s22, 0
      %p83 = por %p81, %p82
      %p84 = scmp.ne.s32.totalorder %s70, %s71
      %p85 = scmp.eq.s32.totalorder %s23, 1
      %p86 = por %p84, %p85
      %p88 = scmp.ne.s32.totalorder %s71, %s87
      %p89 = scmp.eq.s32.totalorder %s23, 0
      %p90 = por %p88, %p89
      %s91 = ssub.s32 %s24, %s36
      %p92 = scmp.eq.s32.totalorder %s91, 0
      %s94 = sadd.s32 %s93, 1
      %s95 = scalar_select %p92, %s93, %s94
      %p98 = pneg %p92
      %p99 = scmp.eq.s32.totalorder %s17, 1
      %p100 = por %p98, %p99
      %p101 = scmp.ne.s32.totalorder %s93, %s96
      %p102 = scmp.eq.s32.totalorder %s17, 0
      %p103 = por %p101, %p102
      %p104 = scmp.ne.s32.totalorder %s93, %s96
      %p105 = scmp.eq.s32.totalorder %s22, 1
      %p106 = por %p104, %p105
      %p107 = scmp.ne.s32.totalorder %s96, %s97
      %p108 = scmp.eq.s32.totalorder %s22, 0
      %p109 = por %p107, %p108
      %p110 = scmp.ne.s32.totalorder %s96, %s97
      %p111 = scmp.eq.s32.totalorder %s23, 1
      %p112 = por %p110, %p111
      %p114 = scmp.ne.s32.totalorder %s97, %s113
      %p115 = scmp.eq.s32.totalorder %s23, 0
      %p116 = por %p114, %p115
      %s117 = ssub.s32 %s24, %s36
      %p118 = scmp.eq.s32.totalorder %s117, 0
      %s120 = sadd.s32 %s119, 1
      %s121 = scalar_select %p118, %s119, %s120
      %p124 = pneg %p118
      %p125 = scmp.eq.s32.totalorder %s17, 1
      %p126 = por %p124, %p125
      %p127 = scmp.ne.s32.totalorder %s119, %s122
      %p128 = scmp.eq.s32.totalorder %s17, 0
      %p129 = por %p127, %p128
      %p130 = scmp.ne.s32.totalorder %s119, %s122
      %p131 = scmp.eq.s32.totalorder %s22, 1
      %p132 = por %p130, %p131
      %p133 = scmp.ne.s32.totalorder %s122, %s123
      %p134 = scmp.eq.s32.totalorder %s22, 0
      %p135 = por %p133, %p134
      %p136 = scmp.ne.s32.totalorder %s122, %s123
      %p137 = scmp.eq.s32.totalorder %s23, 1
      %p138 = por %p136, %p137
      %p140 = scmp.ne.s32.totalorder %s123, %s139
      %p141 = scmp.eq.s32.totalorder %s23, 0
      %p142 = por %p140, %p141
      %s143 = ssub.s32 %s24, %s36
      %s144 = ssub.s32 %s25, %s32
      %s145 = sor.u32 %s143, %s144
      %p146 = scmp.eq.s32.totalorder %s145, 0
      %s148 = sadd.s32 %s147, 1
      %s149 = scalar_select %p146, %s147, %s148
      %p152 = pneg %p146
      %p153 = scmp.eq.s32.totalorder %s17, 1
      %p154 = por %p152, %p153
      %p155 = scmp.ne.s32.totalorder %s147, %s150
      %p156 = scmp.eq.s32.totalorder %s17, 0
      %p157 = por %p155, %p156
      %p158 = scmp.ne.s32.totalorder %s147, %s150
      %p159 = scmp.eq.s32.totalorder %s22, 1
      %p160 = por %p158, %p159
      %p161 = scmp.ne.s32.totalorder %s150, %s151
      %p162 = scmp.eq.s32.totalorder %s22, 0
      %p163 = por %p161, %p162
      %p164 = scmp.ne.s32.totalorder %s150, %s151
      %p165 = scmp.eq.s32.totalorder %s23, 1
      %p166 = por %p164, %p165
      %p168 = scmp.ne.s32.totalorder %s151, %s167
      %p169 = scmp.eq.s32.totalorder %s23, 0
      %p170 = por %p168, %p169
      %s172 = sadd.s32 %s171, 1
      %p175 = scmp.eq.s32.totalorder %s17, 1
      %p176 = scmp.ne.s32.totalorder %s171, %s173
      %p177 = scmp.eq.s32.totalorder %s17, 0
      %p178 = por %p176, %p177
      %p179 = scmp.ne.s32.totalorder %s171, %s173
      %p180 = scmp.eq.s32.totalorder %s22, 1
      %p181 = por %p179, %p180
      %p182 = scmp.ne.s32.totalorder %s173, %s174
      %p183 = scmp.eq.s32.totalorder %s22, 0
      %p184 = por %p182, %p183
      %p185 = scmp.ne.s32.totalorder %s173, %s174
      %p186 = scmp.eq.s32.totalorder %s23, 1
      %p187 = por %p185, %p186
      %p189 = scmp.ne.s32.totalorder %s174, %s188
      %p190 = scmp.eq.s32.totalorder %s23, 0
      %p191 = por %p189, %p190
      %s193 = sadd.s32 %s192, 1
      %p196 = scmp.eq.s32.totalorder %s17, 1
      %p197 = scmp.ne.s32.totalorder %s192, %s194
      %p198 = scmp.eq.s32.totalorder %s17, 0
      %p199 = por %p197, %p198
      %p200 = scmp.ne.s32.totalorder %s192, %s194
      %p201 = scmp.eq.s32.totalorder %s22, 1
      %p202 = por %p200, %p201
      %p203 = scmp.ne.s32.totalorder %s194, %s195
      %p204 = scmp.eq.s32.totalorder %s22, 0
      %p205 = por %p203, %p204
      %p206 = scmp.ne.s32.totalorder %s194, %s195
      %p207 = scmp.eq.s32.totalorder %s23, 1
      %p208 = por %p206, %p207
      %p210 = scmp.ne.s32.totalorder %s195, %s209
      %p211 = scmp.eq.s32.totalorder %s23, 0
      %p212 = por %p210, %p211
      %s213 = ssub.s32 %s24, %s36
      %s214 = ssub.s32 %s25, %s32
      %s215 = sor.u32 %s213, %s214
      %p216 = scmp.eq.s32.totalorder %s215, 0
      %s218 = sadd.s32 %s217, 1
      %s219 = scalar_select %p216, %s217, %s218
      %p222 = pneg %p216
      %p223 = scmp.eq.s32.totalorder %s17, 1
      %p224 = por %p222, %p223
      %p225 = scmp.ne.s32.totalorder %s217, %s220
      %p226 = scmp.eq.s32.totalorder %s17, 0
      %p227 = por %p225, %p226
      %p228 = scmp.ne.s32.totalorder %s217, %s220
      %p229 = scmp.eq.s32.totalorder %s22, 1
      %p230 = por %p228, %p229
      %p231 = scmp.ne.s32.totalorder %s220, %s221
      %p232 = scmp.eq.s32.totalorder %s22, 0
      %p233 = por %p231, %p232
      %p234 = scmp.ne.s32.totalorder %s220, %s221
      %p235 = scmp.eq.s32.totalorder %s23, 1
      %p236 = por %p234, %p235
      %p238 = scmp.ne.s32.totalorder %s221, %s237
      %p239 = scmp.eq.s32.totalorder %s23, 0
      %p240 = por %p238, %p239
      %p241 = scmp.le.s32.totalorder 1, %s17
      %p242 = scmp.lt.s32.totalorder %s17, 3
      %p243 = pnand %p241, %p242
      %p244 = pneg %p243
      // Predicated region
      $region9: #{encoder_layer_forward.4} parent=5 // pred_check
        _
      $region10: #{encoder_layer_forward.4} parent=5 // pred_check_branch
        %246 = sbr.rel (%p243) target = $region12
      $region11: #{encoder_layer_forward.4} parent=5 // pred_region
        %s247 = ssub.s32 %s17, 1
        // Predicated region
        $region13: #{encoder_layer_forward.4} parent=11 // pred_check
          %p248 = pneg %p184
        $region14: #{encoder_layer_forward.4} parent=11 // pred_check_branch
          %250 = sbr.rel (%p248) target = $region16
        $region15: #{encoder_layer_forward.4} parent=11 // pred_region
          %252 = vsyncadd [#allocation6], 0
          %s253 = sshll.u32 %s5, 4
          %s254 = int_to_ptr.hbm [resolvable:$true] %s253
          %s255 = sshll.u32 [#allocation5], 4
          %s256 = int_to_ptr.vmem [resolvable:$true] %s255
          %261 = dma.hbm_to_vmem [thread:$0]  %s254, 256, %s256, [#allocation6], 64, 64, 4
        $region16: #{encoder_layer_forward.4} parent=11 // pred_fallthru
          _
        // Predicated region
        $region17: #{encoder_layer_forward.4} parent=11 // pred_check
          %p262 = pneg %p205
        $region18: #{encoder_layer_forward.4} parent=11 // pred_check_branch
          %264 = sbr.rel (%p262) target = $region20
        $region19: #{encoder_layer_forward.4} parent=11 // pred_region
          %266 = vsyncadd [#allocation6], 0
          %s268 = sshll.u32 %s6, 4
          %s269 = int_to_ptr.hbm [resolvable:$true] %s268
          %s270 = sshll.u32 [#allocation7], 4
          %s271 = int_to_ptr.vmem [resolvable:$true] %s270
          %273 = dma.hbm_to_vmem [thread:$0]  %s269, 16, %s271, [#allocation6]
        $region20: #{encoder_layer_forward.4} parent=11 // pred_fallthru
          _
      $region12: #{encoder_layer_forward.4} parent=5 // pred_fallthru
        _
      %p274 = scmp.lt.s32.totalorder %s17, 2
      // Predicated region
      $region21: #{encoder_layer_forward.4} parent=5 // pred_check
        %p275 = pneg %p274
      $region22: #{encoder_layer_forward.4} parent=5 // pred_check_branch
        %277 = sbr.rel (%p275) target = $region24
      $region23: #{encoder_layer_forward.4} parent=5 // pred_region
        // Predicated region
        $region25: #{encoder_layer_forward.4} parent=23 // pred_check
          %p278 = pneg %p51
        $region26: #{encoder_layer_forward.4} parent=23 // pred_check_branch
          %280 = sbr.rel (%p278) target = $region28
        $region27: #{encoder_layer_forward.4} parent=23 // pred_region
          %p281 = scmp.lt.s32.totalorder %s24, 1
          %s282 = scalar_select %p281, %s24, 1
          %p283 = scmp.lt.s32.totalorder %s25, 0
          %s284 = scalar_select %p283, %s25, 0
          %s285 = sadd.s32 %s284, %s282
          %s286 = smul.addr %s285, 4
          %s287 = scalar_lea.vmem %s0, %s286
        $region28: #{encoder_layer_forward.4} parent=23 // pred_fallthru
          _
        // Predicated region
        $region29: #{encoder_layer_forward.4} parent=23 // pred_check
          %p288 = pneg %p77
        $region30: #{encoder_layer_forward.4} parent=23 // pred_check_branch
          %290 = sbr.rel (%p288) target = $region32
        $region31: #{encoder_layer_forward.4} parent=23 // pred_region
          %p291 = scmp.lt.s32.totalorder %s24, 1
          %s292 = scalar_select %p291, %s24, 1
          %s293 = smul.addr %s292, 4
          %s294 = scalar_lea.vmem %s1, %s293
        $region32: #{encoder_layer_forward.4} parent=23 // pred_fallthru
          _
        // Predicated region
        $region33: #{encoder_layer_forward.4} parent=23 // pred_check
          %p295 = pneg %p103
        $region34: #{encoder_layer_forward.4} parent=23 // pred_check_branch
          %297 = sbr.rel (%p295) target = $region36
        $region35: #{encoder_layer_forward.4} parent=23 // pred_region
          %p298 = scmp.lt.s32.totalorder %s24, 1
          %s299 = scalar_select %p298, %s24, 1
          %s300 = smul.addr %s299, 4
          %s301 = scalar_lea.vmem %s2, %s300
        $region36: #{encoder_layer_forward.4} parent=23 // pred_fallthru
          _
        // Predicated region
        $region37: #{encoder_layer_forward.4} parent=23 // pred_check
          %p302 = pneg %p129
        $region38: #{encoder_layer_forward.4} parent=23 // pred_check_branch
          %304 = sbr.rel (%p302) target = $region40
        $region39: #{encoder_layer_forward.4} parent=23 // pred_region
          %p305 = scmp.lt.s32.totalorder %s24, 1
          %s306 = scalar_select %p305, %s24, 1
          %s307 = scalar_lea.vmem %s3, %s306
        $region40: #{encoder_layer_forward.4} parent=23 // pred_fallthru
          _
        // Predicated region
        $region41: #{encoder_layer_forward.4} parent=23 // pred_check
          %p308 = pneg %p157
        $region42: #{encoder_layer_forward.4} parent=23 // pred_check_branch
          %310 = sbr.rel (%p308) target = $region44
        $region43: #{encoder_layer_forward.4} parent=23 // pred_region
          %s311 = sand.u32 %s147, 1
          %s312 = scalar_lea.sflag [#allocation4], %s311
          %s313 = sand.u32 %s147, 1
          %s314 = smul.addr %s313, 8
          %s315 = scalar_lea.vmem [#allocation3], %s314
          %317 = vsyncadd %s312, 0
          %s318 = sadd.s32 %s25, %s24
          %s319 = smul.addr %s318, 8
          %s320 = scalar_lea.hbm %s4, %s319
          %s322 = sshll.u32 %s320, 4
          %s323 = int_to_ptr.hbm [resolvable:$true] %s322
          %s324 = sshll.u32 %s315, 4
          %s325 = int_to_ptr.vmem [resolvable:$true] %s324
          %327 = dma.hbm_to_vmem [thread:$0]  %s323, 128, %s325, %s312
        $region44: #{encoder_layer_forward.4} parent=23 // pred_fallthru
          _
      $region24: #{encoder_layer_forward.4} parent=5 // pred_fallthru
        _
      %p328 = scmp.le.s32.totalorder 1, %s17
      %p329 = scmp.lt.s32.totalorder %s17, 3
      %p330 = pnand %p328, %p329
      %p331 = pneg %p330
      // Predicated region
      $region45: #{encoder_layer_forward.4} parent=5 // pred_check
        _
      $region46: #{encoder_layer_forward.4} parent=5 // pred_check_branch
        %333 = sbr.rel (%p330) target = $region48
      $region47: #{encoder_layer_forward.4} parent=5 // pred_region
        %s334 = ssub.s32 %s17, 1
        %s335 = sand.u32 %s150, 1
        %s336 = scalar_lea.sflag [#allocation4], %s335
        %s337 = sand.u32 %s150, 1
        %s338 = smul.addr %s337, 8
        %s339 = scalar_lea.vmem [#allocation3], %s338
        // Predicated region
        $region49: #{encoder_layer_forward.4} parent=47 // pred_check
          %p340 = pneg %p163
        $region50: #{encoder_layer_forward.4} parent=47 // pred_check_branch
          %342 = sbr.rel (%p340) target = $region52
        $region51: #{encoder_layer_forward.4} parent=47 // pred_region
          %344 = dma.done %s336, 128
        $region52: #{encoder_layer_forward.4} parent=47 // pred_fallthru
          _
        // Predicated region
        $region53: #{encoder_layer_forward.4} parent=47 // pred_check
          %p345 = pneg %p184
        $region54: #{encoder_layer_forward.4} parent=47 // pred_check_branch
          %347 = sbr.rel (%p345) target = $region56
        $region55: #{encoder_layer_forward.4} parent=47 // pred_region
          %349 = dma.done [#allocation6], 256
        $region56: #{encoder_layer_forward.4} parent=47 // pred_fallthru
          _
        // Predicated region
        $region57: #{encoder_layer_forward.4} parent=47 // pred_check
          %p350 = pneg %p205
        $region58: #{encoder_layer_forward.4} parent=47 // pred_check_branch
          %352 = sbr.rel (%p350) target = $region60
        $region59: #{encoder_layer_forward.4} parent=47 // pred_region
          %354 = dma.done [#allocation6], 16
        $region60: #{encoder_layer_forward.4} parent=47 // pred_fallthru
          _
        %p355 = scmp.lt.s32.totalorder %s26, 1
        %s356 = scalar_select %p355, %s26, 1
        %p357 = scmp.lt.s32.totalorder %s27, 0
        %s358 = scalar_select %p357, %s27, 0
        %s359 = sadd.s32 %s358, %s356
        %s360 = smul.addr %s359, 4
        %s361 = scalar_lea.vmem %s0, %s360
        %p362 = pneg %p57
        %p363 = pneg %p54
        %p364 = scmp.lt.s32.totalorder %s26, 1
        %s365 = scalar_select %p364, %s26, 1
        %s366 = smul.addr %s365, 4
        %s367 = scalar_lea.vmem %s1, %s366
        %p368 = pneg %p83
        %p369 = pneg %p80
        %p370 = scmp.lt.s32.totalorder %s26, 1
        %s371 = scalar_select %p370, %s26, 1
        %s372 = smul.addr %s371, 4
        %s373 = scalar_lea.vmem %s2, %s372
        %p374 = pneg %p109
        %p375 = pneg %p106
        %p376 = scmp.lt.s32.totalorder %s26, 1
        %s377 = scalar_select %p376, %s26, 1
        %s378 = scalar_lea.vmem %s3, %s377
        %p379 = pneg %p135
        %p380 = pneg %p132
        %s381 = sand.u32 %s150, 1
        %s382 = scalar_lea.sflag [#allocation4], %s381
        %s383 = sand.u32 %s150, 1
        %s384 = smul.addr %s383, 8
        %s385 = scalar_lea.vmem [#allocation3], %s384
        %p386 = pneg %p163
        %p387 = pneg %p160
        %p388 = pneg %p184
        %p389 = pneg %p181
        %p390 = pneg %p205
        %p391 = pneg %p202
        %p392 = pneg %p233
        %p393 = pneg %p230
        %p394 = scmp.lt.s32.totalorder %s26, 1
        %s395 = scalar_select %p394, %s26, 1
        %p396 = scmp.lt.s32.totalorder %s27, 0
        %s397 = scalar_select %p396, %s27, 0
        %s398 = sadd.s32 %s397, %s395
        %s399 = smul.addr %s398, 8
        %s400 = scalar_lea.vmem %s7, %s399
        %p401 = scmp.lt.s32.totalorder %s26, 1
        %s402 = scalar_select %p401, %s26, 1
        %p403 = scmp.lt.s32.totalorder %s27, 0
        %s404 = scalar_select %p403, %s27, 0
        %s405 = sadd.s32 %s404, %s402
        %s406 = smul.addr %s405, 4
        %s407 = scalar_lea.vmem %s0, %s406
        %p408 = scmp.lt.s32.totalorder %s26, 1
        %s409 = scalar_select %p408, %s26, 1
        %s410 = smul.addr %s409, 4
        %s411 = scalar_lea.vmem %s1, %s410
        %p412 = scmp.lt.s32.totalorder %s26, 1
        %s413 = scalar_select %p412, %s26, 1
        %s414 = smul.addr %s413, 4
        %s415 = scalar_lea.vmem %s2, %s414
        %p416 = scmp.lt.s32.totalorder %s26, 1
        %s417 = scalar_select %p416, %s26, 1
        %s418 = scalar_lea.vmem %s3, %s417
        %p419 = scmp.lt.s32.totalorder %s26, 1
        %s420 = scalar_select %p419, %s26, 1
        %p421 = scmp.lt.s32.totalorder %s27, 0
        %s422 = scalar_select %p421, %s27, 0
        %s423 = sadd.s32 %s422, %s420
        %s424 = smul.addr %s423, 8
        %s425 = scalar_lea.vmem %s7, %s424
        %v427 = vld [vmem:[%s407] sm:$0xf]
        %v428 = vld [vmem:[%s411] sm:$0xf]
        %v429 = vld [vmem:[%s415] sm:$0xf]
        %v430 = vld [vmem:[%s418] sm:$0x1]
        %vm431 = vcmp.eq.s32.totalorder %v430, 0
        %vm432 = vcmask 64512
        %v434 = vsel %vm432, %v427, 0
        %v437 = vsel %vm432, %v428, 0
        %439 = vmatpush.bf16.xpose.msra.mxu0 0
        %440 = vmatpush.bf16.xpose.msra.mxu0 0
        %441 = vmatpush.bf16.xpose.msra.mxu0 0
        %442 = vmatpush.bf16.xpose.msra.mxu0 0
        %443 = vmatpush.bf16.xpose.msra.mxu0 0
        %444 = vmatpush.bf16.xpose.msra.mxu0 0
        %445 = vmatpush.bf16.xpose.msra.mxu0 0
        %446 = vmatpush.bf16.xpose.msra.mxu0 %v437
        %447 = vmatmul.bf16.gmra.mxu0 %v434
        %v448 = vpop.f32.mrf.mxu0
        %v449 = vadd.f32 0.0, %v448
        %v450 = vpop.f32.mrf.mxu0
        %451 = vdwg.mxu0
        %v452 = vsel %vm431, 1, 0
        %v453 = vperm.slane %v452, 0
        %vm454 = vcmp.eq.s32.totalorder %v453, 1
        %v455 = vsel %vm454, -1e+09, %v449
        %v456 = vsel %vm432, %v455, -inf
        %457 = vmax.xlane.f32.xlu0 %v456
        %v458 = vpop.xlane.xlu0 %457
        %v459 = vsub.f32 %v455, %v458
        %v460 = vmul.f32 %v459, 1.442695
        %v461 = vpow.pop %v460
        %v462 = vsel %vm432, %v461, 0.0
        %463 = vadd.xlane.f32.xlu0 %v462
        %v464 = vpop.xlane.xlu0 %463
        %v465 = vrcp.pop %v464
        %v466 = vmul.f32 %v461, %v465
        %v467 = vpack.c.bf16 %v466, %v466
        %v469 = vsel %vm432, %v467, 0
        %vm471 = vcmask 1043456
        %v473 = vsel %vm471, %v429, 0
        %475 = vmatpush.bf16.msra.mxu0 0
        %476 = vmatpush.bf16.msra.mxu0 0
        %477 = vmatpush.bf16.msra.mxu0 0
        %478 = vmatpush.bf16.msra.mxu0 0
        %479 = vmatpush.bf16.msra.mxu0 0
        %480 = vmatpush.bf16.msra.mxu0 0
        %481 = vmatpush.bf16.msra.mxu0 0
        %482 = vmatpush.bf16.msra.mxu0 %v473
        %483 = vmatmul.bf16.gmra.mxu0 %v469
        %v484 = vpop.f32.mrf.mxu0
        %v485 = vadd.f32 0.0, %v484
        %v486 = vpop.f32.mrf.mxu0
        %487 = vdwg.mxu0
        %v488 = vpack.c.bf16 %v485, %v485
        %vm489 = vcmask 60416
        %490 = vst.msk [vmem:[#allocation2] sm:$0xf] %vm489, %v488
        %v492 = vunpack.c.l.b16 %v427
        %v493 = vpack.c.b16 %v492, %v492
        %494 = vrot.lane.b32.xlu0 %v493, 120
        %v495 = vpop.permute.xlu0 %494
        %v497 = vunpack.c.l.b16 %v428
        %v498 = vpack.c.b16 %v497, %v497
        %499 = vrot.lane.b32.xlu0 %v498, 120
        %v500 = vpop.permute.xlu0 %499
        %v502 = vsel %vm432, %v495, 0
        %v505 = vsel %vm432, %v500, 0
        %507 = vmatpush.bf16.xpose.msra.mxu0 0
        %508 = vmatpush.bf16.xpose.msra.mxu0 0
        %509 = vmatpush.bf16.xpose.msra.mxu0 0
        %510 = vmatpush.bf16.xpose.msra.mxu0 0
        %511 = vmatpush.bf16.xpose.msra.mxu0 0
        %512 = vmatpush.bf16.xpose.msra.mxu0 0
        %513 = vmatpush.bf16.xpose.msra.mxu0 0
        %514 = vmatpush.bf16.xpose.msra.mxu0 %v505
        %515 = vmatmul.bf16.gmra.mxu0 %v502
        %v516 = vpop.f32.mrf.mxu0
        %v517 = vadd.f32 0.0, %v516
        %v518 = vpop.f32.mrf.mxu0
        %519 = vdwg.mxu0
        %v520 = vsel %vm454, -1e+09, %v517
        %v521 = vsel %vm432, %v520, -inf
        %522 = vmax.xlane.f32.xlu0 %v521
        %v523 = vpop.xlane.xlu0 %522
        %v524 = vsub.f32 %v520, %v523
        %v525 = vmul.f32 %v524, 1.442695
        %v526 = vpow.pop %v525
        %v527 = vsel %vm432, %v526, 0.0
        %528 = vadd.xlane.f32.xlu0 %v527
        %v529 = vpop.xlane.xlu0 %528
        %v530 = vrcp.pop %v529
        %v531 = vmul.f32 %v526, %v530
        %v532 = vpack.c.bf16 %v531, %v531
        %v534 = vunpack.c.l.b16 %v429
        %v535 = vpack.c.b16 %v534, %v534
        %536 = vrot.lane.b32.xlu0 %v535, 120
        %v537 = vpop.permute.xlu0 %536
        %v539 = vsel %vm432, %v532, 0
        %v542 = vsel %vm471, %v537, 0
        %544 = vmatpush.bf16.msra.mxu0 0
        %545 = vmatpush.bf16.msra.mxu0 0
        %546 = vmatpush.bf16.msra.mxu0 0
        %547 = vmatpush.bf16.msra.mxu0 0
        %548 = vmatpush.bf16.msra.mxu0 0
        %549 = vmatpush.bf16.msra.mxu0 0
        %550 = vmatpush.bf16.msra.mxu0 0
        %551 = vmatpush.bf16.msra.mxu0 %v542
        %552 = vmatmul.bf16.gmra.mxu0 %v539
        %v553 = vpop.f32.mrf.mxu0
        %v554 = vadd.f32 0.0, %v553
        %v555 = vpop.f32.mrf.mxu0
        %556 = vdwg.mxu0
        %v557 = vpack.c.bf16 %v554, %v554
        %559 = vrot.lane.b32.xlu0 %v557, 8
        %v560 = vpop.permute.xlu0 %559
        %vm562 = vcmask 126016
        %563 = vst.msk [vmem:[#allocation2] sm:$0xf] %vm562, %v560
        %564 = vrot.lane.b32.xlu0 %v493, 112
        %v565 = vpop.permute.xlu0 %564
        %566 = vrot.lane.b32.xlu0 %v498, 112
        %v567 = vpop.permute.xlu0 %566
        %v569 = vsel %vm432, %v565, 0
        %v572 = vsel %vm432, %v567, 0
        %574 = vmatpush.bf16.xpose.msra.mxu0 0
        %575 = vmatpush.bf16.xpose.msra.mxu0 0
        %576 = vmatpush.bf16.xpose.msra.mxu0 0
        %577 = vmatpush.bf16.xpose.msra.mxu0 0
        %578 = vmatpush.bf16.xpose.msra.mxu0 0
        %579 = vmatpush.bf16.xpose.msra.mxu0 0
        %580 = vmatpush.bf16.xpose.msra.mxu0 0
        %581 = vmatpush.bf16.xpose.msra.mxu0 %v572
        %582 = vmatmul.bf16.gmra.mxu0 %v569
        %v583 = vpop.f32.mrf.mxu0
        %v584 = vadd.f32 0.0, %v583
        %v585 = vpop.f32.mrf.mxu0
        %586 = vdwg.mxu0
        %v587 = vsel %vm454, -1e+09, %v584
        %v588 = vsel %vm432, %v587, -inf
        %589 = vmax.xlane.f32.xlu0 %v588
        %v590 = vpop.xlane.xlu0 %589
        %v591 = vsub.f32 %v587, %v590
        %v592 = vmul.f32 %v591, 1.442695
        %v593 = vpow.pop %v592
        %v594 = vsel %vm432, %v593, 0.0
        %595 = vadd.xlane.f32.xlu0 %v594
        %v596 = vpop.xlane.xlu0 %595
        %v597 = vrcp.pop %v596
        %v598 = vmul.f32 %v593, %v597
        %v599 = vpack.c.bf16 %v598, %v598
        %600 = vrot.lane.b32.xlu0 %v535, 112
        %v601 = vpop.permute.xlu0 %600
        %v603 = vsel %vm432, %v599, 0
        %v606 = vsel %vm471, %v601, 0
        %608 = vmatpush.bf16.msra.mxu0 0
        %609 = vmatpush.bf16.msra.mxu0 0
        %610 = vmatpush.bf16.msra.mxu0 0
        %611 = vmatpush.bf16.msra.mxu0 0
        %612 = vmatpush.bf16.msra.mxu0 0
        %613 = vmatpush.bf16.msra.mxu0 0
        %614 = vmatpush.bf16.msra.mxu0 0
        %615 = vmatpush.bf16.msra.mxu0 %v606
        %616 = vmatmul.bf16.gmra.mxu0 %v603
        %v617 = vpop.f32.mrf.mxu0
        %v618 = vadd.f32 0.0, %v617
        %v619 = vpop.f32.mrf.mxu0
        %620 = vdwg.mxu0
        %v621 = vpack.c.bf16 %v618, %v618
        %623 = vrot.lane.b32.xlu0 %v621, 16
        %v624 = vpop.permute.xlu0 %623
        %vm626 = vcmask 191616
        %627 = vst.msk [vmem:[#allocation2] sm:$0xf] %vm626, %v624
        %628 = vrot.lane.b32.xlu0 %v493, 104
        %v629 = vpop.permute.xlu0 %628
        %630 = vrot.lane.b32.xlu0 %v498, 104
        %v631 = vpop.permute.xlu0 %630
        %v633 = vsel %vm432, %v629, 0
        %v636 = vsel %vm432, %v631, 0
        %638 = vmatpush.bf16.xpose.msra.mxu0 0
        %639 = vmatpush.bf16.xpose.msra.mxu0 0
        %640 = vmatpush.bf16.xpose.msra.mxu0 0
        %641 = vmatpush.bf16.xpose.msra.mxu0 0
        %642 = vmatpush.bf16.xpose.msra.mxu0 0
        %643 = vmatpush.bf16.xpose.msra.mxu0 0
        %644 = vmatpush.bf16.xpose.msra.mxu0 0
        %645 = vmatpush.bf16.xpose.msra.mxu0 %v636
        %646 = vmatmul.bf16.gmra.mxu0 %v633
        %v647 = vpop.f32.mrf.mxu0
        %v648 = vadd.f32 0.0, %v647
        %v649 = vpop.f32.mrf.mxu0
        %650 = vdwg.mxu0
        %v651 = vsel %vm454, -1e+09, %v648
        %v652 = vsel %vm432, %v651, -inf
        %653 = vmax.xlane.f32.xlu0 %v652
        %v654 = vpop.xlane.xlu0 %653
        %v655 = vsub.f32 %v651, %v654
        %v656 = vmul.f32 %v655, 1.442695
        %v657 = vpow.pop %v656
        %v658 = vsel %vm432, %v657, 0.0
        %659 = vadd.xlane.f32.xlu0 %v658
        %v660 = vpop.xlane.xlu0 %659
        %v661 = vrcp.pop %v660
        %v662 = vmul.f32 %v657, %v661
        %v663 = vpack.c.bf16 %v662, %v662
        %664 = vrot.lane.b32.xlu0 %v535, 104
        %v665 = vpop.permute.xlu0 %664
        %v667 = vsel %vm432, %v663, 0
        %v670 = vsel %vm471, %v665, 0
        %672 = vmatpush.bf16.msra.mxu0 0
        %673 = vmatpush.bf16.msra.mxu0 0
        %674 = vmatpush.bf16.msra.mxu0 0
        %675 = vmatpush.bf16.msra.mxu0 0
        %676 = vmatpush.bf16.msra.mxu0 0
        %677 = vmatpush.bf16.msra.mxu0 0
        %678 = vmatpush.bf16.msra.mxu0 0
        %679 = vmatpush.bf16.msra.mxu0 %v670
        %680 = vmatmul.bf16.gmra.mxu0 %v667
        %v681 = vpop.f32.mrf.mxu0
        %v682 = vadd.f32 0.0, %v681
        %v683 = vpop.f32.mrf.mxu0
        %684 = vdwg.mxu0
        %v685 = vpack.c.bf16 %v682, %v682
        %687 = vrot.lane.b32.xlu0 %v685, 24
        %v688 = vpop.permute.xlu0 %687
        %vm690 = vcmask 257216
        %691 = vst.msk [vmem:[#allocation2] sm:$0xf] %vm690, %v688
        %v692 = vld [vmem:[%s339] sm:$0xff]
        %v693 = vld [vmem:[#allocation2] sm:$0xf]
        %v694 = vld [vmem:[#allocation5] sm:$0xf]
        %v695 = vld [vmem:[#allocation5 + $0x4] sm:$0xf]
        %v696 = vld [vmem:[#allocation5 + $0x8] sm:$0xf]
        %v697 = vld [vmem:[#allocation5 + $0xc] sm:$0xf]
        %v698 = vld [vmem:[#allocation7] sm:$0x1]
        %v700 = vperm.slane %v698, 0
        %v706 = vunpack.c.l.b16 %v694
        %v707 = vunpack.c.l.b16 %v695
        %v708 = vunpack.c.l.b16 %v696
        %v709 = vunpack.c.l.b16 %v697
        %v710 = vpack.c.b16 %v707, %v706
        %v711 = vpack.c.b16 %v709, %v708
        %vm714 = vcmask 261120
        %v716 = vsel %vm714, %v693, 0
        %718 = vmatpush.bf16.msra.mxu0 0
        %719 = vmatpush.bf16.msra.mxu0 0
        %720 = vmatpush.bf16.msra.mxu0 0
        %721 = vmatpush.bf16.msra.mxu0 0
        %722 = vmatpush.bf16.msra.mxu0 0
        %723 = vmatpush.bf16.msra.mxu0 0
        %724 = vmatpush.bf16.msra.mxu0 %v711
        %725 = vmatpush.bf16.msra.mxu0 %v710
        %726 = vmatmul.bf16.gmra.mxu0 %v716
        %v727 = vpop.f32.mrf.mxu0
        %v728 = vadd.f32 %v700, %v727
        %v729 = vpop.f32.mrf.mxu0
        %730 = vdwg.mxu0
        %v731 = vadd.f32 %v692, %v728
        %732 = vst.msk [vmem:[%s425] sm:$0xff] %vm714, %v731
        %p733 = scmp.lt.s32.totalorder %s26, 1
        %s734 = scalar_select %p733, %s26, 1
        %p735 = scmp.lt.s32.totalorder %s27, 0
        %s736 = scalar_select %p735, %s27, 0
        %s737 = sadd.s32 %s736, %s734
        %s738 = smul.addr %s737, 8
        %s739 = scalar_lea.vmem %s7, %s738
        // Predicated region
        $region61: #{encoder_layer_forward.4} parent=47 // pred_check
          %p740 = pneg %p230
        $region62: #{encoder_layer_forward.4} parent=47 // pred_check_branch
          %742 = sbr.rel (%p740) target = $region64
        $region63: #{encoder_layer_forward.4} parent=47 // pred_region
          _
        $region64: #{encoder_layer_forward.4} parent=47 // pred_fallthru
          _
      $region48: #{encoder_layer_forward.4} parent=5 // pred_fallthru
        _
      %p743 = scmp.le.s32.totalorder 2, %s17
      // Predicated region
      $region65: #{encoder_layer_forward.4} parent=5 // pred_check
        %p744 = pneg %p743
      $region66: #{encoder_layer_forward.4} parent=5 // pred_check_branch
        %746 = sbr.rel (%p744) target = $region68
      $region67: #{encoder_layer_forward.4} parent=5 // pred_region
        %s747 = ssub.s32 %s17, 2
        // Predicated region
        $region69: #{encoder_layer_forward.4} parent=67 // pred_check
          %p748 = pneg %p236
        $region70: #{encoder_layer_forward.4} parent=67 // pred_check_branch
          %750 = sbr.rel (%p748) target = $region72
        $region71: #{encoder_layer_forward.4} parent=67 // pred_region
          %p751 = scmp.lt.s32.totalorder %s28, 1
          %s752 = scalar_select %p751, %s28, 1
          %p753 = scmp.lt.s32.totalorder %s29, 0
          %s754 = scalar_select %p753, %s29, 0
          %s755 = sadd.s32 %s754, %s752
          %s756 = smul.addr %s755, 8
          %s757 = scalar_lea.vmem %s7, %s756
        $region72: #{encoder_layer_forward.4} parent=67 // pred_fallthru
          _
      $region68: #{encoder_layer_forward.4} parent=5 // pred_fallthru
        _
    $region6: #{encoder_layer_forward.4} parent=1 // loop_footer
      %s21 = sadd.s32 1, %s17
    $region7: #{encoder_layer_forward.4} parent=1 // loop_footer_branch
      %16 = sbr.rel target = $region3
    $region8: #{encoder_layer_forward.4} parent=1 // loop_exit
      _
    %758 = vsyncpa [#allocation4], 1
    %s759 = scalar_lea.sflag [#allocation4], 1
    %760 = vsyncpa %s759, 1
    %761 = vsyncpa [#allocation6], 1

</llo_original>
